<compile_context>
chip_gen: v7x
topology: tpu7x:2x2x1
jax: 0.10.0
libtpu: 0.0.40
codegen_flags: <defaults>
</compile_context>

<pallas_src>
import jax
import jax.numpy as jnp
from jax.experimental import pallas as pl
from jax.experimental.pallas import tpu as pltpu

NUM_FEATURES = 1000   # resnet50.fc.out_features
K_PAD = 1024          # 1000 padded up to a multiple of 128 lanes
H1, H2, H3 = 512, 256, 128
NUM_CLASSES = 10
OUT_PAD = 128         # lane-dense output width
BN_EPS = 1e-5
VEC_W = 512           # packed scale/shift block is [8, VEC_W] f32

# Row layout of the packed vector block.
R_CS1, R_T1, R_CS2, R_T2, R_CS3, R_B3, R_CS4, R_B4 = range(8)


def _head_kernel(x_ref, w1_ref, w2_ref, w3_ref, w4_ref, vec_ref, o_ref):
    # Packed per-column scale/shift vectors (static slices on a VMEM ref: free).
    cs1 = vec_ref[R_CS1:R_CS1 + 1, :H1]
    t1 = vec_ref[R_T1:R_T1 + 1, :H1]
    cs2 = vec_ref[R_CS2:R_CS2 + 1, :H2]
    t2 = vec_ref[R_T2:R_T2 + 1, :H2]
    cs3 = vec_ref[R_CS3:R_CS3 + 1, :H3]
    b3 = vec_ref[R_B3:R_B3 + 1, :H3]
    cs4 = vec_ref[R_CS4:R_CS4 + 1, :OUT_PAD]
    b4 = vec_ref[R_B4:R_B4 + 1, :OUT_PAD]

    x = x_ref[...]  # already bf16 [B, K_PAD]

    # Layer 1: ReLU(BN(x @ W1 + b1)); dequant * BN scale folded into cs1,
    # (b1 - mean)*s + beta folded into t1. int8 -> bf16 cast is exact.
    h = jnp.dot(x, w1_ref[...].astype(jnp.bfloat16),
                preferred_element_type=jnp.float32)
    h = jnp.maximum(h * cs1 + t1, 0.0)
    # Dropout(0.5) -> identity at inference.

    # Layer 2: ReLU(BN(h @ W2 + b2))
    h = jnp.dot(h.astype(jnp.bfloat16), w2_ref[...].astype(jnp.bfloat16),
                preferred_element_type=jnp.float32)
    h = jnp.maximum(h * cs2 + t2, 0.0)
    # Dropout(0.5) -> identity at inference.

    # Layer 3: ReLU(h @ W3 + b3); cs3 is the dequant scale.
    h = jnp.dot(h.astype(jnp.bfloat16), w3_ref[...].astype(jnp.bfloat16),
                preferred_element_type=jnp.float32)
    h = jnp.maximum(h * cs3 + b3, 0.0)

    # svm: h @ W4 + b4 (padded to 128 cols -> unmasked lane-dense store)
    h = jnp.dot(h.astype(jnp.bfloat16), w4_ref[...].astype(jnp.bfloat16),
                preferred_element_type=jnp.float32)
    o_ref[...] = (h * cs4 + b4).astype(o_ref.dtype)


def prepare_features(x):
    """Pad [B, 1000] f32 backbone features to [B, 1024] bf16 (done ONCE upstream).

    In a real pipeline this pad+cast belongs in the backbone epilogue so the
    head consumes lane-aligned bf16 directly.
    """
    return jnp.pad(x, ((0, 0), (0, K_PAD - x.shape[1]))).astype(jnp.bfloat16)


def classifier_head(x_padded_bf16, params, slice_output=True):
    """x_padded_bf16: [B, K_PAD] bf16 -> [B, NUM_CLASSES] f32 logits."""
    B = x_padded_bf16.shape[0]
    operands = (
        x_padded_bf16,
        params["w1q"], params["w2q"], params["w3q"], params["w4q"],
        params["vec"],
    )
    vmem = pl.BlockSpec(memory_space=pltpu.MemorySpace.VMEM)

    # Advisory cost estimate so XLA can overlap this sub-10us call with the
    # surrounding (backbone) work.
    weight_elems = K_PAD * H1 + H1 * H2 + H2 * H3 + H3 * OUT_PAD
    flops = 2 * B * weight_elems
    bytes_accessed = (
        1 * weight_elems            # int8 weights
        + 4 * 8 * VEC_W             # packed f32 scale/shift block
        + 2 * B * K_PAD             # bf16 activations in
        + 4 * B * OUT_PAD           # f32 logits out
    )
    cost = pl.CostEstimate(flops=flops, transcendentals=0,
                           bytes_accessed=bytes_accessed)

    out = pl.pallas_call(
        _head_kernel,
        out_shape=jax.ShapeDtypeStruct((B, OUT_PAD), jnp.float32),
        in_specs=[vmem] * len(operands),
        out_specs=vmem,
        cost_estimate=cost,
    )(*operands)
    if slice_output:
        # Padded logit columns are exactly zero; downstream code that tolerates
        # a 128-wide logits buffer can skip this slice (saves one XLA copy).
        return out[:, :NUM_CLASSES]
    return out


def _quantize_int8_per_col(w):
    """Symmetric per-output-column int8 quantization. Returns (wq int8, scale [1,N])."""
    maxabs = jnp.max(jnp.abs(w), axis=0, keepdims=True)
    maxabs = jnp.where(maxabs > 0.0, maxabs, 1.0)   # all-zero (padded) columns
    scale = maxabs / 127.0
    wq = jnp.clip(jnp.round(w / scale), -127.0, 127.0).astype(jnp.int8)
    return wq, scale


def make_params(key):
    """Deterministic synthetic parameters matching the PyTorch module shapes.

    Returns (kernel_params, f32_ref_params): kernel_params hold padded int8
    weights + one packed f32 scale/shift block; f32_ref_params hold the
    unpadded f32 originals (with BN folded to scale/shift).
    """
    ks = jax.random.split(key, 16)

    def lin(kw, kb, fan_in, fan_out):
        bound = 1.0 / jnp.sqrt(fan_in)
        w = jax.random.uniform(kw, (fan_in, fan_out), jnp.float32, -bound, bound)
        b = jax.random.uniform(kb, (1, fan_out), jnp.float32, -bound, bound)
        return w, b

    w1, b1 = lin(ks[0], ks[1], NUM_FEATURES, H1)
    w2, b2 = lin(ks[2], ks[3], H1, H2)
    w3, b3 = lin(ks[4], ks[5], H2, H3)
    w4, b4 = lin(ks[6], ks[7], H3, NUM_CLASSES)

    def bn(kg, kb, km, kv, n):
        gamma = 1.0 + 0.1 * jax.random.normal(kg, (1, n), jnp.float32)
        beta = 0.1 * jax.random.normal(kb, (1, n), jnp.float32)
        mean = 0.1 * jax.random.normal(km, (1, n), jnp.float32)
        var = jnp.abs(jax.random.normal(kv, (1, n), jnp.float32)) + 0.5
        return gamma, beta, mean, var

    g1, be1, m1, v1 = bn(ks[8], ks[9], ks[10], ks[11], H1)
    g2, be2, m2, v2 = bn(ks[12], ks[13], ks[14], ks[15], H2)

    # Fold eval-mode BatchNorm1d (+ preceding Linear bias) into scale/shift:
    #   BN(x@W + b) = (x@W) * s + ((b - mean) * s + beta),  s = gamma/sqrt(var+eps)
    s1 = g1 / jnp.sqrt(v1 + BN_EPS)
    t1 = (b1 - m1) * s1 + be1
    s2 = g2 / jnp.sqrt(v2 + BN_EPS)
    t2 = (b2 - m2) * s2 + be2

    f32_ref = {
        "w1": w1, "s1": s1, "t1": t1,
        "w2": w2, "s2": s2, "t2": t2,
        "w3": w3, "b3": b3,
        "w4": w4, "b4": b4,
    }

    # Pad: w1 rows 1000->1024 (zeros neutralize x padding), w4/b4 cols 10->128.
    w1p = jnp.pad(w1, ((0, K_PAD - NUM_FEATURES), (0, 0)))
    w4p = jnp.pad(w4, ((0, 0), (0, OUT_PAD - NUM_CLASSES)))
    b4p = jnp.pad(b4, ((0, 0), (0, OUT_PAD - NUM_CLASSES)))

    # Quantize in f32 AFTER all folding/padding (single rounding step).
    w1q, q1 = _quantize_int8_per_col(w1p)
    w2q, q2 = _quantize_int8_per_col(w2)
    w3q, q3 = _quantize_int8_per_col(w3)
    w4q, q4 = _quantize_int8_per_col(w4p)

    # Fold dequant scales with the BN scales -> one per-column scale per layer.
    cs1 = q1 * s1
    cs2 = q2 * s2
    cs3 = q3
    cs4 = q4

    # Pack the eight small vectors into a single [8, VEC_W] f32 block (1 DMA).
    vec = jnp.zeros((8, VEC_W), jnp.float32)
    vec = vec.at[R_CS1, :H1].set(cs1[0])
    vec = vec.at[R_T1, :H1].set(t1[0])
    vec = vec.at[R_CS2, :H2].set(cs2[0])
    vec = vec.at[R_T2, :H2].set(t2[0])
    vec = vec.at[R_CS3, :H3].set(cs3[0])
    vec = vec.at[R_B3, :H3].set(b3[0])
    vec = vec.at[R_CS4, :OUT_PAD].set(cs4[0])
    vec = vec.at[R_B4, :OUT_PAD].set(b4p[0])

    kernel_params = {"w1q": w1q, "w2q": w2q, "w3q": w3q, "w4q": w4q, "vec": vec}
    return kernel_params, f32_ref


def reference_head_mirror(xp_bf16, p):
    """Pure-JAX reference mirroring the kernel math exactly (same int8/bf16 path)."""
    vec = p["vec"]
    cs1, t1 = vec[R_CS1:R_CS1 + 1, :H1], vec[R_T1:R_T1 + 1, :H1]
    cs2, t2 = vec[R_CS2:R_CS2 + 1, :H2], vec[R_T2:R_T2 + 1, :H2]
    cs3, b3 = vec[R_CS3:R_CS3 + 1, :H3], vec[R_B3:R_B3 + 1, :H3]
    cs4, b4 = vec[R_CS4:R_CS4 + 1, :OUT_PAD], vec[R_B4:R_B4 + 1, :OUT_PAD]

    def mm(a, wq):
        return jnp.dot(a.astype(jnp.bfloat16), wq.astype(jnp.bfloat16),
                       preferred_element_type=jnp.float32)

    h = jnp.maximum(mm(xp_bf16, p["w1q"]) * cs1 + t1, 0.0)
    h = jnp.maximum(mm(h, p["w2q"]) * cs2 + t2, 0.0)
    h = jnp.maximum(mm(h, p["w3q"]) * cs3 + b3, 0.0)
    return (mm(h, p["w4q"]) * cs4 + b4)[:, :NUM_CLASSES]


def reference_head_f32(x, p):
    """Full-precision reference of the original module head (eval mode)."""
    h = jnp.maximum(x @ p["w1"] * p["s1"] + p["t1"], 0.0)
    h = jnp.maximum(h @ p["w2"] * p["s2"] + p["t2"], 0.0)
    h = jnp.maximum(h @ p["w3"] + p["b3"], 0.0)
    return h @ p["w4"] + p["b4"]


if __name__ == "__main__":
    key = jax.random.PRNGKey(0)
    k_param, k_x = jax.random.split(key)

    B = 2
    # Backbone output features (stand-in for resnet50(img) with img: [2,3,224,224]).
    x = jax.random.normal(k_x, (B, NUM_FEATURES), jnp.float32)
    params, f32_ref_params = make_params(k_param)

    xp = prepare_features(x)                 # [B, 1024] bf16, done once upstream
    out = classifier_head(xp, params)
    out = jax.block_until_ready(out)
    assert out.shape == (B, NUM_CLASSES)

    # Exact-math check against a pure-JAX mirror of the kernel (same int8/bf16 path).
    ref_mirror = reference_head_mirror(xp, params)
    assert jnp.allclose(out, ref_mirror, atol=2e-3, rtol=2e-3)

    # Sanity check against the full-f32 module semantics
    # (bf16 activation + int8 weight quantization noise).
    ref_f32 = reference_head_f32(x, f32_ref_params)
    assert jnp.allclose(out, ref_f32, atol=1e-1, rtol=1e-1)

    print("KERNEL_OK")
</pallas_src>

<mosaic_0001>
module attributes {stable_mosaic.version = 11 : i64} {
  func.func @_head_kernel(%arg0: memref<2x1024xbf16, #tpu.memory_space<vmem>>, %arg1: memref<1024x512xi8, #tpu.memory_space<vmem>>, %arg2: memref<512x256xi8, #tpu.memory_space<vmem>>, %arg3: memref<256x128xi8, #tpu.memory_space<vmem>>, %arg4: memref<128x128xi8, #tpu.memory_space<vmem>>, %arg5: memref<8x512xf32, #tpu.memory_space<vmem>>, %arg6: memref<2x128xf32, #tpu.memory_space<vmem>>) attributes {dimension_semantics = [], scalar_prefetch = 0 : i64, scratch_operands = 0 : i64, tpu.core_type = #tpu.core_type<tc>} {
    %c0 = arith.constant 0 : index
    %c0_0 = arith.constant 0 : index
    %0 = vector.load %arg5[%c0, %c0_0] : memref<8x512xf32, #tpu.memory_space<vmem>>, vector<1x512xf32>
    %c1 = arith.constant 1 : index
    %c0_1 = arith.constant 0 : index
    %1 = vector.load %arg5[%c1, %c0_1] : memref<8x512xf32, #tpu.memory_space<vmem>>, vector<1x512xf32>
    %c2 = arith.constant 2 : index
    %c0_2 = arith.constant 0 : index
    %2 = vector.load %arg5[%c2, %c0_2] : memref<8x512xf32, #tpu.memory_space<vmem>>, vector<1x256xf32>
    %c3 = arith.constant 3 : index
    %c0_3 = arith.constant 0 : index
    %3 = vector.load %arg5[%c3, %c0_3] : memref<8x512xf32, #tpu.memory_space<vmem>>, vector<1x256xf32>
    %c4 = arith.constant 4 : index
    %c0_4 = arith.constant 0 : index
    %4 = vector.load %arg5[%c4, %c0_4] : memref<8x512xf32, #tpu.memory_space<vmem>>, vector<1x128xf32>
    %c5 = arith.constant 5 : index
    %c0_5 = arith.constant 0 : index
    %5 = vector.load %arg5[%c5, %c0_5] : memref<8x512xf32, #tpu.memory_space<vmem>>, vector<1x128xf32>
    %c6 = arith.constant 6 : index
    %c0_6 = arith.constant 0 : index
    %6 = vector.load %arg5[%c6, %c0_6] : memref<8x512xf32, #tpu.memory_space<vmem>>, vector<1x128xf32>
    %c7 = arith.constant 7 : index
    %c0_7 = arith.constant 0 : index
    %7 = vector.load %arg5[%c7, %c0_7] : memref<8x512xf32, #tpu.memory_space<vmem>>, vector<1x128xf32>
    %c0_8 = arith.constant 0 : index
    %c0_9 = arith.constant 0 : index
    %8 = vector.load %arg0[%c0_8, %c0_9] : memref<2x1024xbf16, #tpu.memory_space<vmem>>, vector<2x1024xbf16>
    %c0_10 = arith.constant 0 : index
    %c0_11 = arith.constant 0 : index
    %9 = vector.load %arg1[%c0_10, %c0_11] : memref<1024x512xi8, #tpu.memory_space<vmem>>, vector<1024x512xi8>
    %10 = arith.sitofp %9 : vector<1024x512xi8> to vector<1024x512xbf16>
    %cst = arith.constant dense<0.000000e+00> : vector<2x512xf32>
    %11 = tpu.matmul %8, %10, %cst {dimension_numbers = #tpu.dot_dimension_numbers<[1], [0], [0], [1], [0, 0, 1, 1], [], []>} : vector<2x1024xbf16>, vector<1024x512xbf16>, vector<2x512xf32> -> vector<2x512xf32>
    %12 = vector.broadcast %0 : vector<1x512xf32> to vector<2x512xf32>
    %13 = arith.mulf %11, %12 : vector<2x512xf32>
    %14 = vector.broadcast %1 : vector<1x512xf32> to vector<2x512xf32>
    %15 = arith.addf %13, %14 : vector<2x512xf32>
    %cst_12 = arith.constant 0.000000e+00 : f32
    %16 = vector.broadcast %cst_12 : f32 to vector<2x512xf32>
    %17 = arith.maximumf %15, %16 : vector<2x512xf32>
    %18 = arith.truncf %17 : vector<2x512xf32> to vector<2x512xbf16>
    %c0_13 = arith.constant 0 : index
    %c0_14 = arith.constant 0 : index
    %19 = vector.load %arg2[%c0_13, %c0_14] : memref<512x256xi8, #tpu.memory_space<vmem>>, vector<512x256xi8>
    %20 = arith.sitofp %19 : vector<512x256xi8> to vector<512x256xbf16>
    %cst_15 = arith.constant dense<0.000000e+00> : vector<2x256xf32>
    %21 = tpu.matmul %18, %20, %cst_15 {dimension_numbers = #tpu.dot_dimension_numbers<[1], [0], [0], [1], [0, 0, 1, 1], [], []>} : vector<2x512xbf16>, vector<512x256xbf16>, vector<2x256xf32> -> vector<2x256xf32>
    %22 = vector.broadcast %2 : vector<1x256xf32> to vector<2x256xf32>
    %23 = arith.mulf %21, %22 : vector<2x256xf32>
    %24 = vector.broadcast %3 : vector<1x256xf32> to vector<2x256xf32>
    %25 = arith.addf %23, %24 : vector<2x256xf32>
    %cst_16 = arith.constant 0.000000e+00 : f32
    %26 = vector.broadcast %cst_16 : f32 to vector<2x256xf32>
    %27 = arith.maximumf %25, %26 : vector<2x256xf32>
    %28 = arith.truncf %27 : vector<2x256xf32> to vector<2x256xbf16>
    %c0_17 = arith.constant 0 : index
    %c0_18 = arith.constant 0 : index
    %29 = vector.load %arg3[%c0_17, %c0_18] : memref<256x128xi8, #tpu.memory_space<vmem>>, vector<256x128xi8>
    %30 = arith.sitofp %29 : vector<256x128xi8> to vector<256x128xbf16>
    %cst_19 = arith.constant dense<0.000000e+00> : vector<2x128xf32>
    %31 = tpu.matmul %28, %30, %cst_19 {dimension_numbers = #tpu.dot_dimension_numbers<[1], [0], [0], [1], [0, 0, 1, 1], [], []>} : vector<2x256xbf16>, vector<256x128xbf16>, vector<2x128xf32> -> vector<2x128xf32>
    %32 = vector.broadcast %4 : vector<1x128xf32> to vector<2x128xf32>
    %33 = arith.mulf %31, %32 : vector<2x128xf32>
    %34 = vector.broadcast %5 : vector<1x128xf32> to vector<2x128xf32>
    %35 = arith.addf %33, %34 : vector<2x128xf32>
    %cst_20 = arith.constant 0.000000e+00 : f32
    %36 = vector.broadcast %cst_20 : f32 to vector<2x128xf32>
    %37 = arith.maximumf %35, %36 : vector<2x128xf32>
    %38 = arith.truncf %37 : vector<2x128xf32> to vector<2x128xbf16>
    %c0_21 = arith.constant 0 : index
    %c0_22 = arith.constant 0 : index
    %39 = vector.load %arg4[%c0_21, %c0_22] : memref<128x128xi8, #tpu.memory_space<vmem>>, vector<128x128xi8>
    %40 = arith.sitofp %39 : vector<128x128xi8> to vector<128x128xbf16>
    %cst_23 = arith.constant dense<0.000000e+00> : vector<2x128xf32>
    %41 = tpu.matmul %38, %40, %cst_23 {dimension_numbers = #tpu.dot_dimension_numbers<[1], [0], [0], [1], [0, 0, 1, 1], [], []>} : vector<2x128xbf16>, vector<128x128xbf16>, vector<2x128xf32> -> vector<2x128xf32>
    %42 = vector.broadcast %6 : vector<1x128xf32> to vector<2x128xf32>
    %43 = arith.mulf %41, %42 : vector<2x128xf32>
    %44 = vector.broadcast %7 : vector<1x128xf32> to vector<2x128xf32>
    %45 = arith.addf %43, %44 : vector<2x128xf32>
    %c0_24 = arith.constant 0 : index
    %c0_25 = arith.constant 0 : index
    %46 = vector.load %arg6[%c0_24, %c0_25] : memref<2x128xf32, #tpu.memory_space<vmem>>, vector<2x128xf32>
    tpu.vector_store %arg6[%c0_24, %c0_25], %45 {strides = array<i32>} : memref<2x128xf32, #tpu.memory_space<vmem>>, vector<2x128xf32>,
    return
  }
}

</mosaic_0001>

<llo_original>
// kernel: tpu_custom_call.1
$region0: #{tpu_custom_call.1}
  #allocation0 [shape = 'u32[]', space=smem, size = 0x4, offset = 0x4, fixed_abs, tag = 'smem constant byte address 0x4 - core index']
  #allocation1 [shape = 'u32[144,128]{1,0:T(1,128)}', space=vmem, size = 0x12000, scoped, tag = 'internal scratch']
  %s0 = inlined_call_operand.hbm [shape: bf16[2,1024], index: 0, kind: input, shape index: {}]
  %s1 = inlined_call_operand.hbm [shape: s8[1024,512], index: 1, kind: input, shape index: {}]
  %s2 = inlined_call_operand.hbm [shape: s8[512,256], index: 2, kind: input, shape index: {}]
  %s3 = inlined_call_operand.hbm [shape: s8[256,128], index: 3, kind: input, shape index: {}]
  %s4 = inlined_call_operand.hbm [shape: s8[128,128], index: 4, kind: input, shape index: {}]
  %s5 = inlined_call_operand.hbm [shape: f32[8,512], index: 5, kind: input, shape index: {}]
  %s6 = inlined_call_operand.hbm [shape: f32[2,128], index: 6, kind: output, shape index: {}]
  %s7 = sld [smem:[#allocation0]]
  $region58: #{tpu_custom_call.1} parent=0
    _
  %s9 = ssub.s32 1, %s7
  %s10 = scalar_select 0, %s9, %s7
  $region1: #{tpu_custom_call.1} parent=0
    #allocation2 [shape = 'u8[4096]{0}', space=vmem, size = 0x1000, scoped, tag = 'input window, operand 0, single buffered']
    #allocation3 [shape = 's32[1]{0}', space=sflag, size = 0x4, scoped, tag = 'scoped memory for tpu_custom_call.1']
    #allocation4 [shape = 's32[1]{0}', space=sflag, size = 0x4, scoped, tag = 'scoped memory for tpu_custom_call.1']
    #allocation5 [shape = 'u8[524288]{0}', space=vmem, size = 0x80000, scoped, tag = 'input window, operand 1, single buffered']
    #allocation6 [shape = 's32[1]{0}', space=sflag, size = 0x4, scoped, tag = 'scoped memory for tpu_custom_call.1']
    #allocation7 [shape = 'u8[131072]{0}', space=vmem, size = 0x20000, scoped, tag = 'input window, operand 2, single buffered']
    #allocation8 [shape = 'u8[32768]{0}', space=vmem, size = 0x8000, scoped, tag = 'input window, operand 3, single buffered']
    #allocation9 [shape = 's32[1]{0}', space=sflag, size = 0x4, scoped, tag = 'scoped memory for tpu_custom_call.1']
    #allocation10 [shape = 'u8[16384]{0}', space=vmem, size = 0x4000, scoped, tag = 'input window, operand 4, single buffered']
    #allocation11 [shape = 'u8[16384]{0}', space=vmem, size = 0x4000, scoped, tag = 'input window, operand 5, single buffered']
    #allocation12 [shape = 's32[1]{0}', space=sflag, size = 0x4, scoped, tag = 'scoped memory for tpu_custom_call.1']
    #allocation13 [shape = 'u8[1024]{0}', space=vmem, size = 0x400, scoped, tag = 'output window, operand 0, single buffered']
    %11 = vsyncpa [#allocation3], 0
    %12 = vsyncpa [#allocation6], 0
    %13 = vsyncpa [#allocation9], 0
    %14 = vsyncpa [#allocation12], 0
    %15 = vsyncpa [#allocation4], 0
    // Predicated region
    $region2: #{tpu_custom_call.1} parent=1 // pred_check
      _
    $region3: #{tpu_custom_call.1} parent=1 // pred_check_branch
      %17 = sbr.rel (0) target = $region5
    $region4: #{tpu_custom_call.1} parent=1 // pred_region
      %s19 = ssub.s32 128, 128
      %20 = vsyncadd [#allocation3], %s19
      %s22 = sshll.u32 [#allocation2], 4
      %s23 = int_to_ptr.vmem [resolvable:$true] %s22
      %25 = dma.hbm_to_vmem [thread:$0]  %s0, 128, %s23, [#allocation3]
    $region5: #{tpu_custom_call.1} parent=1 // pred_fallthru
      _
    // Predicated region
    $region6: #{tpu_custom_call.1} parent=1 // pred_check
      _
    $region7: #{tpu_custom_call.1} parent=1 // pred_check_branch
      %27 = sbr.rel (0) target = $region9
    $region8: #{tpu_custom_call.1} parent=1 // pred_region
      %s29 = ssub.s32 16384, 16384
      %30 = vsyncadd [#allocation6], %s29
      %s31 = sshll.u32 [#allocation5], 4
      %s32 = int_to_ptr.vmem [resolvable:$true] %s31
      %37 = dma.hbm_to_vmem [thread:$0]  %s1, 16384, %s32, [#allocation6], 512, 512, 32
    $region9: #{tpu_custom_call.1} parent=1 // pred_fallthru
      _
    // Predicated region
    $region10: #{tpu_custom_call.1} parent=1 // pred_check
      _
    $region11: #{tpu_custom_call.1} parent=1 // pred_check_branch
      %39 = sbr.rel (0) target = $region13
    $region12: #{tpu_custom_call.1} parent=1 // pred_region
      %s41 = ssub.s32 4096, 4096
      %42 = vsyncadd [#allocation6], %s41
      %s43 = sshll.u32 [#allocation7], 4
      %s44 = int_to_ptr.vmem [resolvable:$true] %s43
      %49 = dma.hbm_to_vmem [thread:$0]  %s2, 4096, %s44, [#allocation6], 256, 256, 16
    $region13: #{tpu_custom_call.1} parent=1 // pred_fallthru
      _
    // Predicated region
    $region14: #{tpu_custom_call.1} parent=1 // pred_check
      _
    $region15: #{tpu_custom_call.1} parent=1 // pred_check_branch
      %51 = sbr.rel (0) target = $region17
    $region16: #{tpu_custom_call.1} parent=1 // pred_region
      %s53 = ssub.s32 1024, 1024
      %54 = vsyncadd [#allocation9], %s53
      %s55 = sshll.u32 [#allocation8], 4
      %s56 = int_to_ptr.vmem [resolvable:$true] %s55
      %61 = dma.hbm_to_vmem [thread:$0]  %s3, 1024, %s56, [#allocation9], 128, 128, 8
    $region17: #{tpu_custom_call.1} parent=1 // pred_fallthru
      _
    // Predicated region
    $region18: #{tpu_custom_call.1} parent=1 // pred_check
      _
    $region19: #{tpu_custom_call.1} parent=1 // pred_check_branch
      %63 = sbr.rel (0) target = $region21
    $region20: #{tpu_custom_call.1} parent=1 // pred_region
      %s65 = ssub.s32 512, 512
      %66 = vsyncadd [#allocation9], %s65
      %s67 = sshll.u32 [#allocation10], 4
      %s68 = int_to_ptr.vmem [resolvable:$true] %s67
      %73 = dma.hbm_to_vmem [thread:$0]  %s4, 512, %s68, [#allocation9], 128, 128, 8
    $region21: #{tpu_custom_call.1} parent=1 // pred_fallthru
      _
    // Predicated region
    $region22: #{tpu_custom_call.1} parent=1 // pred_check
      _
    $region23: #{tpu_custom_call.1} parent=1 // pred_check_branch
      %75 = sbr.rel (0) target = $region25
    $region24: #{tpu_custom_call.1} parent=1 // pred_region
      %s77 = ssub.s32 512, 512
      %78 = vsyncadd [#allocation12], %s77
      %s80 = sshll.u32 [#allocation11], 4
      %s81 = int_to_ptr.vmem [resolvable:$true] %s80
      %83 = dma.hbm_to_vmem [thread:$0]  %s5, 512, %s81, [#allocation12]
    $region25: #{tpu_custom_call.1} parent=1 // pred_fallthru
      _
    // Predicated region
    $region26: #{tpu_custom_call.1} parent=1 // pred_check
      _
    $region27: #{tpu_custom_call.1} parent=1 // pred_check_branch
      %85 = sbr.rel (0) target = $region29
    $region28: #{tpu_custom_call.1} parent=1 // pred_region
      %86 = dma.done [#allocation3], 128
    $region29: #{tpu_custom_call.1} parent=1 // pred_fallthru
      _
    // Predicated region
    $region30: #{tpu_custom_call.1} parent=1 // pred_check
      _
    $region31: #{tpu_custom_call.1} parent=1 // pred_check_branch
      %88 = sbr.rel (0) target = $region33
    $region32: #{tpu_custom_call.1} parent=1 // pred_region
      %89 = dma.done [#allocation6], 16384
    $region33: #{tpu_custom_call.1} parent=1 // pred_fallthru
      _
    // Predicated region
    $region34: #{tpu_custom_call.1} parent=1 // pred_check
      _
    $region35: #{tpu_custom_call.1} parent=1 // pred_check_branch
      %91 = sbr.rel (0) target = $region37
    $region36: #{tpu_custom_call.1} parent=1 // pred_region
      %92 = dma.done [#allocation6], 4096
    $region37: #{tpu_custom_call.1} parent=1 // pred_fallthru
      _
    // Predicated region
    $region38: #{tpu_custom_call.1} parent=1 // pred_check
      _
    $region39: #{tpu_custom_call.1} parent=1 // pred_check_branch
      %94 = sbr.rel (0) target = $region41
    $region40: #{tpu_custom_call.1} parent=1 // pred_region
      %95 = dma.done [#allocation9], 1024
    $region41: #{tpu_custom_call.1} parent=1 // pred_fallthru
      _
    // Predicated region
    $region42: #{tpu_custom_call.1} parent=1 // pred_check
      _
    $region43: #{tpu_custom_call.1} parent=1 // pred_check_branch
      %97 = sbr.rel (0) target = $region45
    $region44: #{tpu_custom_call.1} parent=1 // pred_region
      %98 = dma.done [#allocation9], 512
    $region45: #{tpu_custom_call.1} parent=1 // pred_fallthru
      _
    // Predicated region
    $region46: #{tpu_custom_call.1} parent=1 // pred_check
      _
    $region47: #{tpu_custom_call.1} parent=1 // pred_check_branch
      %100 = sbr.rel (0) target = $region49
    $region48: #{tpu_custom_call.1} parent=1 // pred_region
      %101 = dma.done [#allocation12], 512
    $region49: #{tpu_custom_call.1} parent=1 // pred_fallthru
      _
    %v103 = vld [vmem:[#allocation11] ss:$8 sm:$0xf]
    %s104 = scalar_lea.vmem [#allocation11], 1
    %v105 = vld [vmem:[%s104] ss:$8 sm:$0xf]
    %s106 = scalar_lea.vmem [#allocation11], 2
    %v107 = vld [vmem:[%s106] ss:$8 sm:$0x3]
    %s108 = scalar_lea.vmem [#allocation11], 3
    %v109 = vld [vmem:[%s108] ss:$8 sm:$0x3]
    %v110 = vld [vmem:[#allocation11 + $0x4] ss:$0 sm:$0xff]
    %v111 = vld [vmem:[#allocation11 + $0x5] ss:$0 sm:$0xff]
    %v112 = vld [vmem:[#allocation11 + $0x6] ss:$0 sm:$0xff]
    %v113 = vld [vmem:[#allocation11 + $0x7] ss:$0 sm:$0xff]
    %v114 = vld [vmem:[#allocation2] sm:$0xff]
    %v115 = vld [vmem:[#allocation5] sm:$0xff]
    %v116 = vld [vmem:[#allocation5 + $0x8] sm:$0xff]
    %v117 = vld [vmem:[#allocation5 + $0x10] sm:$0xff]
    %v118 = vld [vmem:[#allocation5 + $0x18] sm:$0xff]
    %v119 = vld [vmem:[#allocation5 + $0x20] sm:$0xff]
    %v120 = vld [vmem:[#allocation5 + $0x28] sm:$0xff]
    %v121 = vld [vmem:[#allocation5 + $0x30] sm:$0xff]
    %v122 = vld [vmem:[#allocation5 + $0x38] sm:$0xff]
    %v123 = vld [vmem:[#allocation5 + $0x40] sm:$0xff]
    %v124 = vld [vmem:[#allocation5 + $0x48] sm:$0xff]
    %v125 = vld [vmem:[#allocation5 + $0x50] sm:$0xff]
    %v126 = vld [vmem:[#allocation5 + $0x58] sm:$0xff]
    %v127 = vld [vmem:[#allocation5 + $0x60] sm:$0xff]
    %v128 = vld [vmem:[#allocation5 + $0x68] sm:$0xff]
    %v129 = vld [vmem:[#allocation5 + $0x70] sm:$0xff]
    %v130 = vld [vmem:[#allocation5 + $0x78] sm:$0xff]
    %v131 = vld [vmem:[#allocation5 + $0x80] sm:$0xff]
    %v132 = vld [vmem:[#allocation5 + $0x88] sm:$0xff]
    %v133 = vld [vmem:[#allocation5 + $0x90] sm:$0xff]
    %v134 = vld [vmem:[#allocation5 + $0x98] sm:$0xff]
    %v135 = vld [vmem:[#allocation5 + $0xa0] sm:$0xff]
    %v136 = vld [vmem:[#allocation5 + $0xa8] sm:$0xff]
    %v137 = vld [vmem:[#allocation5 + $0xb0] sm:$0xff]
    %v138 = vld [vmem:[#allocation5 + $0xb8] sm:$0xff]
    %v139 = vld [vmem:[#allocation5 + $0xc0] sm:$0xff]
    %v140 = vld [vmem:[#allocation5 + $0xc8] sm:$0xff]
    %v141 = vld [vmem:[#allocation5 + $0xd0] sm:$0xff]
    %v142 = vld [vmem:[#allocation5 + $0xd8] sm:$0xff]
    %v143 = vld [vmem:[#allocation5 + $0xe0] sm:$0xff]
    %v144 = vld [vmem:[#allocation5 + $0xe8] sm:$0xff]
    %v145 = vld [vmem:[#allocation5 + $0xf0] sm:$0xff]
    %v146 = vld [vmem:[#allocation5 + $0xf8] sm:$0xff]
    %v147 = vld [vmem:[#allocation5 + $0x100] sm:$0xff]
    %v148 = vld [vmem:[#allocation5 + $0x108] sm:$0xff]
    %v149 = vld [vmem:[#allocation5 + $0x110] sm:$0xff]
    %v150 = vld [vmem:[#allocation5 + $0x118] sm:$0xff]
    %v151 = vld [vmem:[#allocation5 + $0x120] sm:$0xff]
    %v152 = vld [vmem:[#allocation5 + $0x128] sm:$0xff]
    %v153 = vld [vmem:[#allocation5 + $0x130] sm:$0xff]
    %v154 = vld [vmem:[#allocation5 + $0x138] sm:$0xff]
    %v155 = vld [vmem:[#allocation5 + $0x140] sm:$0xff]
    %v156 = vld [vmem:[#allocation5 + $0x148] sm:$0xff]
    %v157 = vld [vmem:[#allocation5 + $0x150] sm:$0xff]
    %v158 = vld [vmem:[#allocation5 + $0x158] sm:$0xff]
    %v159 = vld [vmem:[#allocation5 + $0x160] sm:$0xff]
    %v160 = vld [vmem:[#allocation5 + $0x168] sm:$0xff]
    %v161 = vld [vmem:[#allocation5 + $0x170] sm:$0xff]
    %v162 = vld [vmem:[#allocation5 + $0x178] sm:$0xff]
    %v163 = vld [vmem:[#allocation5 + $0x180] sm:$0xff]
    %v164 = vld [vmem:[#allocation5 + $0x188] sm:$0xff]
    %v165 = vld [vmem:[#allocation5 + $0x190] sm:$0xff]
    %v166 = vld [vmem:[#allocation5 + $0x198] sm:$0xff]
    %v167 = vld [vmem:[#allocation5 + $0x1a0] sm:$0xff]
    %v168 = vld [vmem:[#allocation5 + $0x1a8] sm:$0xff]
    %v169 = vld [vmem:[#allocation5 + $0x1b0] sm:$0xff]
    %v170 = vld [vmem:[#allocation5 + $0x1b8] sm:$0xff]
    %v171 = vld [vmem:[#allocation5 + $0x1c0] sm:$0xff]
    %v172 = vld [vmem:[#allocation5 + $0x1c8] sm:$0xff]
    %v173 = vld [vmem:[#allocation5 + $0x1d0] sm:$0xff]
    %v174 = vld [vmem:[#allocation5 + $0x1d8] sm:$0xff]
    %v175 = vld [vmem:[#allocation5 + $0x1e0] sm:$0xff]
    %v176 = vld [vmem:[#allocation5 + $0x1e8] sm:$0xff]
    %v177 = vld [vmem:[#allocation5 + $0x1f0] sm:$0xff]
    %v178 = vld [vmem:[#allocation5 + $0x1f8] sm:$0xff]
    %v179 = vld [vmem:[#allocation5 + $0x200] sm:$0xff]
    %v180 = vld [vmem:[#allocation5 + $0x208] sm:$0xff]
    %v181 = vld [vmem:[#allocation5 + $0x210] sm:$0xff]
    %v182 = vld [vmem:[#allocation5 + $0x218] sm:$0xff]
    %v183 = vld [vmem:[#allocation5 + $0x220] sm:$0xff]
    %v184 = vld [vmem:[#allocation5 + $0x228] sm:$0xff]
    %v185 = vld [vmem:[#allocation5 + $0x230] sm:$0xff]
    %v186 = vld [vmem:[#allocation5 + $0x238] sm:$0xff]
    %v187 = vld [vmem:[#allocation5 + $0x240] sm:$0xff]
    %v188 = vld [vmem:[#allocation5 + $0x248] sm:$0xff]
    %v189 = vld [vmem:[#allocation5 + $0x250] sm:$0xff]
    %v190 = vld [vmem:[#allocation5 + $0x258] sm:$0xff]
    %v191 = vld [vmem:[#allocation5 + $0x260] sm:$0xff]
    %v192 = vld [vmem:[#allocation5 + $0x268] sm:$0xff]
    %v193 = vld [vmem:[#allocation5 + $0x270] sm:$0xff]
    %v194 = vld [vmem:[#allocation5 + $0x278] sm:$0xff]
    %v195 = vld [vmem:[#allocation5 + $0x280] sm:$0xff]
    %v196 = vld [vmem:[#allocation5 + $0x288] sm:$0xff]
    %v197 = vld [vmem:[#allocation5 + $0x290] sm:$0xff]
    %v198 = vld [vmem:[#allocation5 + $0x298] sm:$0xff]
    %v199 = vld [vmem:[#allocation5 + $0x2a0] sm:$0xff]
    %v200 = vld [vmem:[#allocation5 + $0x2a8] sm:$0xff]
    %v201 = vld [vmem:[#allocation5 + $0x2b0] sm:$0xff]
    %v202 = vld [vmem:[#allocation5 + $0x2b8] sm:$0xff]
    %v203 = vld [vmem:[#allocation5 + $0x2c0] sm:$0xff]
    %v204 = vld [vmem:[#allocation5 + $0x2c8] sm:$0xff]
    %v205 = vld [vmem:[#allocation5 + $0x2d0] sm:$0xff]
    %v206 = vld [vmem:[#allocation5 + $0x2d8] sm:$0xff]
    %v207 = vld [vmem:[#allocation5 + $0x2e0] sm:$0xff]
    %v208 = vld [vmem:[#allocation5 + $0x2e8] sm:$0xff]
    %v209 = vld [vmem:[#allocation5 + $0x2f0] sm:$0xff]
    %v210 = vld [vmem:[#allocation5 + $0x2f8] sm:$0xff]
    %v211 = vld [vmem:[#allocation5 + $0x300] sm:$0xff]
    %v212 = vld [vmem:[#allocation5 + $0x308] sm:$0xff]
    %v213 = vld [vmem:[#allocation5 + $0x310] sm:$0xff]
    %v214 = vld [vmem:[#allocation5 + $0x318] sm:$0xff]
    %v215 = vld [vmem:[#allocation5 + $0x320] sm:$0xff]
    %v216 = vld [vmem:[#allocation5 + $0x328] sm:$0xff]
    %v217 = vld [vmem:[#allocation5 + $0x330] sm:$0xff]
    %v218 = vld [vmem:[#allocation5 + $0x338] sm:$0xff]
    %v219 = vld [vmem:[#allocation5 + $0x340] sm:$0xff]
    %v220 = vld [vmem:[#allocation5 + $0x348] sm:$0xff]
    %v221 = vld [vmem:[#allocation5 + $0x350] sm:$0xff]
    %v222 = vld [vmem:[#allocation5 + $0x358] sm:$0xff]
    %v223 = vld [vmem:[#allocation5 + $0x360] sm:$0xff]
    %v224 = vld [vmem:[#allocation5 + $0x368] sm:$0xff]
    %v225 = vld [vmem:[#allocation5 + $0x370] sm:$0xff]
    %v226 = vld [vmem:[#allocation5 + $0x378] sm:$0xff]
    %v227 = vld [vmem:[#allocation5 + $0x380] sm:$0xff]
    %v228 = vld [vmem:[#allocation5 + $0x388] sm:$0xff]
    %v229 = vld [vmem:[#allocation5 + $0x390] sm:$0xff]
    %v230 = vld [vmem:[#allocation5 + $0x398] sm:$0xff]
    %v231 = vld [vmem:[#allocation5 + $0x3a0] sm:$0xff]
    %v232 = vld [vmem:[#allocation5 + $0x3a8] sm:$0xff]
    %v233 = vld [vmem:[#allocation5 + $0x3b0] sm:$0xff]
    %v234 = vld [vmem:[#allocation5 + $0x3b8] sm:$0xff]
    %v235 = vld [vmem:[#allocation5 + $0x3c0] sm:$0xff]
    %v236 = vld [vmem:[#allocation5 + $0x3c8] sm:$0xff]
    %v237 = vld [vmem:[#allocation5 + $0x3d0] sm:$0xff]
    %v238 = vld [vmem:[#allocation5 + $0x3d8] sm:$0xff]
    %v239 = vld [vmem:[#allocation5 + $0x3e0] sm:$0xff]
    %v240 = vld [vmem:[#allocation5 + $0x3e8] sm:$0xff]
    %v241 = vld [vmem:[#allocation5 + $0x3f0] sm:$0xff]
    %v242 = vld [vmem:[#allocation5 + $0x3f8] sm:$0xff]
    %v243 = vunpack.c.l.s8.bf16 %v115
    %v244 = vunpack.c.l.s8.bf16 %v116
    %v245 = vunpack.c.l.s8.bf16 %v117
    %v246 = vunpack.c.l.s8.bf16 %v118
    %v247 = vunpack.c.h.s8.bf16 %v115
    %v248 = vunpack.c.h.s8.bf16 %v116
    %v249 = vunpack.c.h.s8.bf16 %v117
    %v250 = vunpack.c.h.s8.bf16 %v118
    %v251 = vunpack.c.l.s8.bf16 %v119
    %v252 = vunpack.c.l.s8.bf16 %v120
    %v253 = vunpack.c.l.s8.bf16 %v121
    %v254 = vunpack.c.l.s8.bf16 %v122
    %v255 = vunpack.c.h.s8.bf16 %v119
    %v256 = vunpack.c.h.s8.bf16 %v120
    %v257 = vunpack.c.h.s8.bf16 %v121
    %v258 = vunpack.c.h.s8.bf16 %v122
    %v259 = vunpack.c.l.s8.bf16 %v123
    %v260 = vunpack.c.l.s8.bf16 %v124
    %v261 = vunpack.c.l.s8.bf16 %v125
    %v262 = vunpack.c.l.s8.bf16 %v126
    %v263 = vunpack.c.h.s8.bf16 %v123
    %v264 = vunpack.c.h.s8.bf16 %v124
    %v265 = vunpack.c.h.s8.bf16 %v125
    %v266 = vunpack.c.h.s8.bf16 %v126
    %v267 = vunpack.c.l.s8.bf16 %v127
    %v268 = vunpack.c.l.s8.bf16 %v128
    %v269 = vunpack.c.l.s8.bf16 %v129
    %v270 = vunpack.c.l.s8.bf16 %v130
    %v271 = vunpack.c.h.s8.bf16 %v127
    %v272 = vunpack.c.h.s8.bf16 %v128
    %v273 = vunpack.c.h.s8.bf16 %v129
    %v274 = vunpack.c.h.s8.bf16 %v130
    %v275 = vunpack.c.l.s8.bf16 %v131
    %v276 = vunpack.c.l.s8.bf16 %v132
    %v277 = vunpack.c.l.s8.bf16 %v133
    %v278 = vunpack.c.l.s8.bf16 %v134
    %v279 = vunpack.c.h.s8.bf16 %v131
    %v280 = vunpack.c.h.s8.bf16 %v132
    %v281 = vunpack.c.h.s8.bf16 %v133
    %v282 = vunpack.c.h.s8.bf16 %v134
    %v283 = vunpack.c.l.s8.bf16 %v135
    %v284 = vunpack.c.l.s8.bf16 %v136
    %v285 = vunpack.c.l.s8.bf16 %v137
    %v286 = vunpack.c.l.s8.bf16 %v138
    %v287 = vunpack.c.h.s8.bf16 %v135
    %v288 = vunpack.c.h.s8.bf16 %v136
    %v289 = vunpack.c.h.s8.bf16 %v137
    %v290 = vunpack.c.h.s8.bf16 %v138
    %v291 = vunpack.c.l.s8.bf16 %v139
    %v292 = vunpack.c.l.s8.bf16 %v140
    %v293 = vunpack.c.l.s8.bf16 %v141
    %v294 = vunpack.c.l.s8.bf16 %v142
    %v295 = vunpack.c.h.s8.bf16 %v139
    %v296 = vunpack.c.h.s8.bf16 %v140
    %v297 = vunpack.c.h.s8.bf16 %v141
    %v298 = vunpack.c.h.s8.bf16 %v142
    %v299 = vunpack.c.l.s8.bf16 %v143
    %v300 = vunpack.c.l.s8.bf16 %v144
    %v301 = vunpack.c.l.s8.bf16 %v145
    %v302 = vunpack.c.l.s8.bf16 %v146
    %v303 = vunpack.c.h.s8.bf16 %v143
    %v304 = vunpack.c.h.s8.bf16 %v144
    %v305 = vunpack.c.h.s8.bf16 %v145
    %v306 = vunpack.c.h.s8.bf16 %v146
    %v307 = vunpack.c.l.s8.bf16 %v147
    %v308 = vunpack.c.l.s8.bf16 %v148
    %v309 = vunpack.c.l.s8.bf16 %v149
    %v310 = vunpack.c.l.s8.bf16 %v150
    %v311 = vunpack.c.h.s8.bf16 %v147
    %v312 = vunpack.c.h.s8.bf16 %v148
    %v313 = vunpack.c.h.s8.bf16 %v149
    %v314 = vunpack.c.h.s8.bf16 %v150
    %v315 = vunpack.c.l.s8.bf16 %v151
    %v316 = vunpack.c.l.s8.bf16 %v152
    %v317 = vunpack.c.l.s8.bf16 %v153
    %v318 = vunpack.c.l.s8.bf16 %v154
    %v319 = vunpack.c.h.s8.bf16 %v151
    %v320 = vunpack.c.h.s8.bf16 %v152
    %v321 = vunpack.c.h.s8.bf16 %v153
    %v322 = vunpack.c.h.s8.bf16 %v154
    %v323 = vunpack.c.l.s8.bf16 %v155
    %v324 = vunpack.c.l.s8.bf16 %v156
    %v325 = vunpack.c.l.s8.bf16 %v157
    %v326 = vunpack.c.l.s8.bf16 %v158
    %v327 = vunpack.c.h.s8.bf16 %v155
    %v328 = vunpack.c.h.s8.bf16 %v156
    %v329 = vunpack.c.h.s8.bf16 %v157
    %v330 = vunpack.c.h.s8.bf16 %v158
    %v331 = vunpack.c.l.s8.bf16 %v159
    %v332 = vunpack.c.l.s8.bf16 %v160
    %v333 = vunpack.c.l.s8.bf16 %v161
    %v334 = vunpack.c.l.s8.bf16 %v162
    %v335 = vunpack.c.h.s8.bf16 %v159
    %v336 = vunpack.c.h.s8.bf16 %v160
    %v337 = vunpack.c.h.s8.bf16 %v161
    %v338 = vunpack.c.h.s8.bf16 %v162
    %v339 = vunpack.c.l.s8.bf16 %v163
    %v340 = vunpack.c.l.s8.bf16 %v164
    %v341 = vunpack.c.l.s8.bf16 %v165
    %v342 = vunpack.c.l.s8.bf16 %v166
    %v343 = vunpack.c.h.s8.bf16 %v163
    %v344 = vunpack.c.h.s8.bf16 %v164
    %v345 = vunpack.c.h.s8.bf16 %v165
    %v346 = vunpack.c.h.s8.bf16 %v166
    %v347 = vunpack.c.l.s8.bf16 %v167
    %v348 = vunpack.c.l.s8.bf16 %v168
    %v349 = vunpack.c.l.s8.bf16 %v169
    %v350 = vunpack.c.l.s8.bf16 %v170
    %v351 = vunpack.c.h.s8.bf16 %v167
    %v352 = vunpack.c.h.s8.bf16 %v168
    %v353 = vunpack.c.h.s8.bf16 %v169
    %v354 = vunpack.c.h.s8.bf16 %v170
    %v355 = vunpack.c.l.s8.bf16 %v171
    %v356 = vunpack.c.l.s8.bf16 %v172
    %v357 = vunpack.c.l.s8.bf16 %v173
    %v358 = vunpack.c.l.s8.bf16 %v174
    %v359 = vunpack.c.h.s8.bf16 %v171
    %v360 = vunpack.c.h.s8.bf16 %v172
    %v361 = vunpack.c.h.s8.bf16 %v173
    %v362 = vunpack.c.h.s8.bf16 %v174
    %v363 = vunpack.c.l.s8.bf16 %v175
    %v364 = vunpack.c.l.s8.bf16 %v176
    %v365 = vunpack.c.l.s8.bf16 %v177
    %v366 = vunpack.c.l.s8.bf16 %v178
    %v367 = vunpack.c.h.s8.bf16 %v175
    %v368 = vunpack.c.h.s8.bf16 %v176
    %v369 = vunpack.c.h.s8.bf16 %v177
    %v370 = vunpack.c.h.s8.bf16 %v178
    %v371 = vunpack.c.l.s8.bf16 %v179
    %v372 = vunpack.c.l.s8.bf16 %v180
    %v373 = vunpack.c.l.s8.bf16 %v181
    %v374 = vunpack.c.l.s8.bf16 %v182
    %v375 = vunpack.c.h.s8.bf16 %v179
    %v376 = vunpack.c.h.s8.bf16 %v180
    %v377 = vunpack.c.h.s8.bf16 %v181
    %v378 = vunpack.c.h.s8.bf16 %v182
    %v379 = vunpack.c.l.s8.bf16 %v183
    %v380 = vunpack.c.l.s8.bf16 %v184
    %v381 = vunpack.c.l.s8.bf16 %v185
    %v382 = vunpack.c.l.s8.bf16 %v186
    %v383 = vunpack.c.h.s8.bf16 %v183
    %v384 = vunpack.c.h.s8.bf16 %v184
    %v385 = vunpack.c.h.s8.bf16 %v185
    %v386 = vunpack.c.h.s8.bf16 %v186
    %v387 = vunpack.c.l.s8.bf16 %v187
    %v388 = vunpack.c.l.s8.bf16 %v188
    %v389 = vunpack.c.l.s8.bf16 %v189
    %v390 = vunpack.c.l.s8.bf16 %v190
    %v391 = vunpack.c.h.s8.bf16 %v187
    %v392 = vunpack.c.h.s8.bf16 %v188
    %v393 = vunpack.c.h.s8.bf16 %v189
    %v394 = vunpack.c.h.s8.bf16 %v190
    %v395 = vunpack.c.l.s8.bf16 %v191
    %v396 = vunpack.c.l.s8.bf16 %v192
    %v397 = vunpack.c.l.s8.bf16 %v193
    %v398 = vunpack.c.l.s8.bf16 %v194
    %v399 = vunpack.c.h.s8.bf16 %v191
    %v400 = vunpack.c.h.s8.bf16 %v192
    %v401 = vunpack.c.h.s8.bf16 %v193
    %v402 = vunpack.c.h.s8.bf16 %v194
    %v403 = vunpack.c.l.s8.bf16 %v195
    %v404 = vunpack.c.l.s8.bf16 %v196
    %v405 = vunpack.c.l.s8.bf16 %v197
    %v406 = vunpack.c.l.s8.bf16 %v198
    %v407 = vunpack.c.h.s8.bf16 %v195
    %v408 = vunpack.c.h.s8.bf16 %v196
    %v409 = vunpack.c.h.s8.bf16 %v197
    %v410 = vunpack.c.h.s8.bf16 %v198
    %v411 = vunpack.c.l.s8.bf16 %v199
    %v412 = vunpack.c.l.s8.bf16 %v200
    %v413 = vunpack.c.l.s8.bf16 %v201
    %v414 = vunpack.c.l.s8.bf16 %v202
    %v415 = vunpack.c.h.s8.bf16 %v199
    %v416 = vunpack.c.h.s8.bf16 %v200
    %v417 = vunpack.c.h.s8.bf16 %v201
    %v418 = vunpack.c.h.s8.bf16 %v202
    %v419 = vunpack.c.l.s8.bf16 %v203
    %v420 = vunpack.c.l.s8.bf16 %v204
    %v421 = vunpack.c.l.s8.bf16 %v205
    %v422 = vunpack.c.l.s8.bf16 %v206
    %v423 = vunpack.c.h.s8.bf16 %v203
    %v424 = vunpack.c.h.s8.bf16 %v204
    %v425 = vunpack.c.h.s8.bf16 %v205
    %v426 = vunpack.c.h.s8.bf16 %v206
    %v427 = vunpack.c.l.s8.bf16 %v207
    %v428 = vunpack.c.l.s8.bf16 %v208
    %v429 = vunpack.c.l.s8.bf16 %v209
    %v430 = vunpack.c.l.s8.bf16 %v210
    %v431 = vunpack.c.h.s8.bf16 %v207
    %v432 = vunpack.c.h.s8.bf16 %v208
    %v433 = vunpack.c.h.s8.bf16 %v209
    %v434 = vunpack.c.h.s8.bf16 %v210
    %v435 = vunpack.c.l.s8.bf16 %v211
    %v436 = vunpack.c.l.s8.bf16 %v212
    %v437 = vunpack.c.l.s8.bf16 %v213
    %v438 = vunpack.c.l.s8.bf16 %v214
    %v439 = vunpack.c.h.s8.bf16 %v211
    %v440 = vunpack.c.h.s8.bf16 %v212
    %v441 = vunpack.c.h.s8.bf16 %v213
    %v442 = vunpack.c.h.s8.bf16 %v214
    %v443 = vunpack.c.l.s8.bf16 %v215
    %v444 = vunpack.c.l.s8.bf16 %v216
    %v445 = vunpack.c.l.s8.bf16 %v217
    %v446 = vunpack.c.l.s8.bf16 %v218
    %v447 = vunpack.c.h.s8.bf16 %v215
    %v448 = vunpack.c.h.s8.bf16 %v216
    %v449 = vunpack.c.h.s8.bf16 %v217
    %v450 = vunpack.c.h.s8.bf16 %v218
    %v451 = vunpack.c.l.s8.bf16 %v219
    %v452 = vunpack.c.l.s8.bf16 %v220
    %v453 = vunpack.c.l.s8.bf16 %v221
    %v454 = vunpack.c.l.s8.bf16 %v222
    %v455 = vunpack.c.h.s8.bf16 %v219
    %v456 = vunpack.c.h.s8.bf16 %v220
    %v457 = vunpack.c.h.s8.bf16 %v221
    %v458 = vunpack.c.h.s8.bf16 %v222
    %v459 = vunpack.c.l.s8.bf16 %v223
    %v460 = vunpack.c.l.s8.bf16 %v224
    %v461 = vunpack.c.l.s8.bf16 %v225
    %v462 = vunpack.c.l.s8.bf16 %v226
    %v463 = vunpack.c.h.s8.bf16 %v223
    %v464 = vunpack.c.h.s8.bf16 %v224
    %v465 = vunpack.c.h.s8.bf16 %v225
    %v466 = vunpack.c.h.s8.bf16 %v226
    %v467 = vunpack.c.l.s8.bf16 %v227
    %v468 = vunpack.c.l.s8.bf16 %v228
    %v469 = vunpack.c.l.s8.bf16 %v229
    %v470 = vunpack.c.l.s8.bf16 %v230
    %v471 = vunpack.c.h.s8.bf16 %v227
    %v472 = vunpack.c.h.s8.bf16 %v228
    %v473 = vunpack.c.h.s8.bf16 %v229
    %v474 = vunpack.c.h.s8.bf16 %v230
    %v475 = vunpack.c.l.s8.bf16 %v231
    %v476 = vunpack.c.l.s8.bf16 %v232
    %v477 = vunpack.c.l.s8.bf16 %v233
    %v478 = vunpack.c.l.s8.bf16 %v234
    %v479 = vunpack.c.h.s8.bf16 %v231
    %v480 = vunpack.c.h.s8.bf16 %v232
    %v481 = vunpack.c.h.s8.bf16 %v233
    %v482 = vunpack.c.h.s8.bf16 %v234
    %v483 = vunpack.c.l.s8.bf16 %v235
    %v484 = vunpack.c.l.s8.bf16 %v236
    %v485 = vunpack.c.l.s8.bf16 %v237
    %v486 = vunpack.c.l.s8.bf16 %v238
    %v487 = vunpack.c.h.s8.bf16 %v235
    %v488 = vunpack.c.h.s8.bf16 %v236
    %v489 = vunpack.c.h.s8.bf16 %v237
    %v490 = vunpack.c.h.s8.bf16 %v238
    %v491 = vunpack.c.l.s8.bf16 %v239
    %v492 = vunpack.c.l.s8.bf16 %v240
    %v493 = vunpack.c.l.s8.bf16 %v241
    %v494 = vunpack.c.l.s8.bf16 %v242
    %v495 = vunpack.c.h.s8.bf16 %v239
    %v496 = vunpack.c.h.s8.bf16 %v240
    %v497 = vunpack.c.h.s8.bf16 %v241
    %v498 = vunpack.c.h.s8.bf16 %v242
    %v500 = vcombine.high %v114, %v114
    %v502 = vunpack.c.l.s4 1966171168
    %v503 = vunpack.c.0.s8 %v502
    %v504 = vlaneseq
    %v505 = vshrl.u32 %v504, 7
    %v506 = vsub.s32 %v503, %v505
    %v507 = vrot.slane %v114, %v506
    %v509 = vunpack.c.l.s4 1966171168
    %v510 = vunpack.c.0.s8 %v509
    %v511 = vlaneseq
    %v512 = vshrl.u32 %v511, 7
    %v513 = vsub.s32 %v510, %v512
    %v514 = vrot.slane %v500, %v513
    %v515 = vcombine.high %v507, %v507
    %v516 = vcombine.high %v514, %v514
    %v518 = vunpack.c.l.s4 1966171168
    %v519 = vunpack.c.0.s8 %v518
    %v520 = vlaneseq
    %v521 = vshrl.u32 %v520, 7
    %v522 = vsub.s32 %v519, %v521
    %v523 = vrot.slane %v507, %v522
    %v525 = vunpack.c.l.s4 1966171168
    %v526 = vunpack.c.0.s8 %v525
    %v527 = vlaneseq
    %v528 = vshrl.u32 %v527, 7
    %v529 = vsub.s32 %v526, %v528
    %v530 = vrot.slane %v514, %v529
    %v532 = vunpack.c.l.s4 1966171168
    %v533 = vunpack.c.0.s8 %v532
    %v534 = vlaneseq
    %v535 = vshrl.u32 %v534, 7
    %v536 = vsub.s32 %v533, %v535
    %v537 = vrot.slane %v515, %v536
    %v539 = vunpack.c.l.s4 1966171168
    %v540 = vunpack.c.0.s8 %v539
    %v541 = vlaneseq
    %v542 = vshrl.u32 %v541, 7
    %v543 = vsub.s32 %v540, %v542
    %v544 = vrot.slane %v516, %v543
    %v545 = vcombine.high %v523, %v523
    %v546 = vcombine.high %v530, %v530
    %v547 = vcombine.high %v537, %v537
    %v548 = vcombine.high %v544, %v544
    %557 = vmatprep.subr.bf16.mxu0 %v244
    %558 = vmatpush1.bf16.msra.mxu0 %v243
    %559 = vmatprep.subr.bf16.mxu0 %v248
    %560 = vmatpush1.bf16.msra.mxu0 %v247
    %561 = vmatprep.subr.bf16.mxu0 %v252
    %562 = vmatpush1.bf16.msra.mxu0 %v251
    %563 = vmatprep.subr.bf16.mxu0 %v256
    %564 = vmatpush1.bf16.msra.mxu0 %v255
    %565 = vmatprep.subr.bf16.mxu0 %v260
    %566 = vmatpush1.bf16.msra.mxu0 %v259
    %567 = vmatprep.subr.bf16.mxu0 %v264
    %568 = vmatpush1.bf16.msra.mxu0 %v263
    %569 = vmatprep.subr.bf16.mxu0 %v268
    %570 = vmatpush1.bf16.msra.mxu0 %v267
    %571 = vmatprep.subr.bf16.mxu0 %v272
    %572 = vmatpush1.bf16.msra.mxu0 %v271
    %573 = vmatprep.subr.bf16.mxu0 %v276
    %574 = vmatpush1.bf16.msra.mxu0 %v275
    %575 = vmatprep.subr.bf16.mxu0 %v280
    %576 = vmatpush1.bf16.msra.mxu0 %v279
    %577 = vmatprep.subr.bf16.mxu0 %v284
    %578 = vmatpush1.bf16.msra.mxu0 %v283
    %579 = vmatprep.subr.bf16.mxu0 %v288
    %580 = vmatpush1.bf16.msra.mxu0 %v287
    %581 = vmatprep.subr.bf16.mxu0 %v292
    %582 = vmatpush1.bf16.msra.mxu0 %v291
    %583 = vmatprep.subr.bf16.mxu0 %v296
    %584 = vmatpush1.bf16.msra.mxu0 %v295
    %585 = vmatprep.subr.bf16.mxu0 %v300
    %586 = vmatpush1.bf16.msra.mxu0 %v299
    %587 = vmatprep.subr.bf16.mxu0 %v304
    %588 = vmatpush1.bf16.msra.mxu0 %v303
    %589 = vmatprep.mubr.bf16.mxu0 %v537
    %590 = vmatmul.mubr.bf16.gmra.mrb[0].mxu0 %v523
    %v591 = vpop.f32.mrb[0].mxu0
    %v592 = vadd.f32 0.0, %v591
    %v593 = vpop.f32.mrb[0].mxu0
    %v594 = vadd.f32 0.0, %v593
    %v595 = vpop.f32.mrb[0].mxu0
    %v596 = vpop.f32.mrb[0].mxu0
    %597 = vdwg.mxu0
    %598 = vmatprep.subr.bf16.mxu0 %v308
    %599 = vmatpush1.bf16.msra.mxu0 %v307
    %600 = vmatprep.subr.bf16.mxu0 %v312
    %601 = vmatpush1.bf16.msra.mxu0 %v311
    %602 = vmatprep.subr.bf16.mxu0 %v316
    %603 = vmatpush1.bf16.msra.mxu0 %v315
    %604 = vmatprep.subr.bf16.mxu0 %v320
    %605 = vmatpush1.bf16.msra.mxu0 %v319
    %606 = vmatprep.subr.bf16.mxu0 %v324
    %607 = vmatpush1.bf16.msra.mxu0 %v323
    %608 = vmatprep.subr.bf16.mxu0 %v328
    %609 = vmatpush1.bf16.msra.mxu0 %v327
    %610 = vmatprep.subr.bf16.mxu0 %v332
    %611 = vmatpush1.bf16.msra.mxu0 %v331
    %612 = vmatprep.subr.bf16.mxu0 %v336
    %613 = vmatpush1.bf16.msra.mxu0 %v335
    %614 = vmatprep.subr.bf16.mxu0 %v340
    %615 = vmatpush1.bf16.msra.mxu0 %v339
    %616 = vmatprep.subr.bf16.mxu0 %v344
    %617 = vmatpush1.bf16.msra.mxu0 %v343
    %618 = vmatprep.subr.bf16.mxu0 %v348
    %619 = vmatpush1.bf16.msra.mxu0 %v347
    %620 = vmatprep.subr.bf16.mxu0 %v352
    %621 = vmatpush1.bf16.msra.mxu0 %v351
    %622 = vmatprep.subr.bf16.mxu0 %v356
    %623 = vmatpush1.bf16.msra.mxu0 %v355
    %624 = vmatprep.subr.bf16.mxu0 %v360
    %625 = vmatpush1.bf16.msra.mxu0 %v359
    %626 = vmatprep.subr.bf16.mxu0 %v364
    %627 = vmatpush1.bf16.msra.mxu0 %v363
    %628 = vmatprep.subr.bf16.mxu0 %v368
    %629 = vmatpush1.bf16.msra.mxu0 %v367
    %630 = vmatprep.mubr.bf16.mxu0 %v547
    %631 = vmatmul.mubr.bf16.gmra.mrb[0].mxu0 %v545
    %v632 = vpop.f32.mrb[0].mxu0
    %v633 = vadd.f32 %v592, %v632
    %v634 = vpop.f32.mrb[0].mxu0
    %v635 = vadd.f32 %v594, %v634
    %v636 = vpop.f32.mrb[0].mxu0
    %v637 = vpop.f32.mrb[0].mxu0
    %638 = vdwg.mxu0
    %639 = vmatprep.subr.bf16.mxu0 %v372
    %640 = vmatpush1.bf16.msra.mxu0 %v371
    %641 = vmatprep.subr.bf16.mxu0 %v376
    %642 = vmatpush1.bf16.msra.mxu0 %v375
    %643 = vmatprep.subr.bf16.mxu0 %v380
    %644 = vmatpush1.bf16.msra.mxu0 %v379
    %645 = vmatprep.subr.bf16.mxu0 %v384
    %646 = vmatpush1.bf16.msra.mxu0 %v383
    %647 = vmatprep.subr.bf16.mxu0 %v388
    %648 = vmatpush1.bf16.msra.mxu0 %v387
    %649 = vmatprep.subr.bf16.mxu0 %v392
    %650 = vmatpush1.bf16.msra.mxu0 %v391
    %651 = vmatprep.subr.bf16.mxu0 %v396
    %652 = vmatpush1.bf16.msra.mxu0 %v395
    %653 = vmatprep.subr.bf16.mxu0 %v400
    %654 = vmatpush1.bf16.msra.mxu0 %v399
    %655 = vmatprep.subr.bf16.mxu0 %v404
    %656 = vmatpush1.bf16.msra.mxu0 %v403
    %657 = vmatprep.subr.bf16.mxu0 %v408
    %658 = vmatpush1.bf16.msra.mxu0 %v407
    %659 = vmatprep.subr.bf16.mxu0 %v412
    %660 = vmatpush1.bf16.msra.mxu0 %v411
    %661 = vmatprep.subr.bf16.mxu0 %v416
    %662 = vmatpush1.bf16.msra.mxu0 %v415
    %663 = vmatprep.subr.bf16.mxu0 %v420
    %664 = vmatpush1.bf16.msra.mxu0 %v419
    %665 = vmatprep.subr.bf16.mxu0 %v424
    %666 = vmatpush1.bf16.msra.mxu0 %v423
    %667 = vmatprep.subr.bf16.mxu0 %v428
    %668 = vmatpush1.bf16.msra.mxu0 %v427
    %669 = vmatprep.subr.bf16.mxu0 %v432
    %670 = vmatpush1.bf16.msra.mxu0 %v431
    %671 = vmatprep.mubr.bf16.mxu0 %v544
    %672 = vmatmul.mubr.bf16.gmra.mrb[0].mxu0 %v530
    %v673 = vpop.f32.mrb[0].mxu0
    %v674 = vadd.f32 %v633, %v673
    %v675 = vpop.f32.mrb[0].mxu0
    %v676 = vadd.f32 %v635, %v675
    %v677 = vpop.f32.mrb[0].mxu0
    %v678 = vpop.f32.mrb[0].mxu0
    %679 = vdwg.mxu0
    %680 = vmatprep.subr.bf16.mxu0 %v436
    %681 = vmatpush1.bf16.msra.mxu0 %v435
    %682 = vmatprep.subr.bf16.mxu0 %v440
    %683 = vmatpush1.bf16.msra.mxu0 %v439
    %684 = vmatprep.subr.bf16.mxu0 %v444
    %685 = vmatpush1.bf16.msra.mxu0 %v443
    %686 = vmatprep.subr.bf16.mxu0 %v448
    %687 = vmatpush1.bf16.msra.mxu0 %v447
    %688 = vmatprep.subr.bf16.mxu0 %v452
    %689 = vmatpush1.bf16.msra.mxu0 %v451
    %690 = vmatprep.subr.bf16.mxu0 %v456
    %691 = vmatpush1.bf16.msra.mxu0 %v455
    %692 = vmatprep.subr.bf16.mxu0 %v460
    %693 = vmatpush1.bf16.msra.mxu0 %v459
    %694 = vmatprep.subr.bf16.mxu0 %v464
    %695 = vmatpush1.bf16.msra.mxu0 %v463
    %696 = vmatprep.subr.bf16.mxu0 %v468
    %697 = vmatpush1.bf16.msra.mxu0 %v467
    %698 = vmatprep.subr.bf16.mxu0 %v472
    %699 = vmatpush1.bf16.msra.mxu0 %v471
    %700 = vmatprep.subr.bf16.mxu0 %v476
    %701 = vmatpush1.bf16.msra.mxu0 %v475
    %702 = vmatprep.subr.bf16.mxu0 %v480
    %703 = vmatpush1.bf16.msra.mxu0 %v479
    %704 = vmatprep.subr.bf16.mxu0 %v484
    %705 = vmatpush1.bf16.msra.mxu0 %v483
    %706 = vmatprep.subr.bf16.mxu0 %v488
    %707 = vmatpush1.bf16.msra.mxu0 %v487
    %708 = vmatprep.subr.bf16.mxu0 %v492
    %709 = vmatpush1.bf16.msra.mxu0 %v491
    %710 = vmatprep.subr.bf16.mxu0 %v496
    %711 = vmatpush1.bf16.msra.mxu0 %v495
    %712 = vmatprep.mubr.bf16.mxu0 %v548
    %713 = vmatmul.mubr.bf16.gmra.mrb[0].mxu0 %v546
    %v714 = vpop.f32.mrb[0].mxu0
    %v715 = vadd.f32 %v674, %v714
    %v716 = vpop.f32.mrb[0].mxu0
    %v717 = vadd.f32 %v676, %v716
    %v718 = vpop.f32.mrb[0].mxu0
    %v719 = vpop.f32.mrb[0].mxu0
    %720 = vdwg.mxu0
    %721 = vmatprep.subr.bf16.mxu0 %v246
    %722 = vmatpush1.bf16.msra.mxu0 %v245
    %723 = vmatprep.subr.bf16.mxu0 %v250
    %724 = vmatpush1.bf16.msra.mxu0 %v249
    %725 = vmatprep.subr.bf16.mxu0 %v254
    %726 = vmatpush1.bf16.msra.mxu0 %v253
    %727 = vmatprep.subr.bf16.mxu0 %v258
    %728 = vmatpush1.bf16.msra.mxu0 %v257
    %729 = vmatprep.subr.bf16.mxu0 %v262
    %730 = vmatpush1.bf16.msra.mxu0 %v261
    %731 = vmatprep.subr.bf16.mxu0 %v266
    %732 = vmatpush1.bf16.msra.mxu0 %v265
    %733 = vmatprep.subr.bf16.mxu0 %v270
    %734 = vmatpush1.bf16.msra.mxu0 %v269
    %735 = vmatprep.subr.bf16.mxu0 %v274
    %736 = vmatpush1.bf16.msra.mxu0 %v273
    %737 = vmatprep.subr.bf16.mxu0 %v278
    %738 = vmatpush1.bf16.msra.mxu0 %v277
    %739 = vmatprep.subr.bf16.mxu0 %v282
    %740 = vmatpush1.bf16.msra.mxu0 %v281
    %741 = vmatprep.subr.bf16.mxu0 %v286
    %742 = vmatpush1.bf16.msra.mxu0 %v285
    %743 = vmatprep.subr.bf16.mxu0 %v290
    %744 = vmatpush1.bf16.msra.mxu0 %v289
    %745 = vmatprep.subr.bf16.mxu0 %v294
    %746 = vmatpush1.bf16.msra.mxu0 %v293
    %747 = vmatprep.subr.bf16.mxu0 %v298
    %748 = vmatpush1.bf16.msra.mxu0 %v297
    %749 = vmatprep.subr.bf16.mxu0 %v302
    %750 = vmatpush1.bf16.msra.mxu0 %v301
    %751 = vmatprep.subr.bf16.mxu0 %v306
    %752 = vmatpush1.bf16.msra.mxu0 %v305
    %753 = vmatprep.mubr.bf16.mxu0 %v537
    %754 = vmatmul.mubr.bf16.gmra.mrb[0].mxu0 %v523
    %v755 = vpop.f32.mrb[0].mxu0
    %v756 = vadd.f32 0.0, %v755
    %v757 = vpop.f32.mrb[0].mxu0
    %v758 = vadd.f32 0.0, %v757
    %v759 = vpop.f32.mrb[0].mxu0
    %v760 = vpop.f32.mrb[0].mxu0
    %761 = vdwg.mxu0
    %762 = vmatprep.subr.bf16.mxu0 %v310
    %763 = vmatpush1.bf16.msra.mxu0 %v309
    %764 = vmatprep.subr.bf16.mxu0 %v314
    %765 = vmatpush1.bf16.msra.mxu0 %v313
    %766 = vmatprep.subr.bf16.mxu0 %v318
    %767 = vmatpush1.bf16.msra.mxu0 %v317
    %768 = vmatprep.subr.bf16.mxu0 %v322
    %769 = vmatpush1.bf16.msra.mxu0 %v321
    %770 = vmatprep.subr.bf16.mxu0 %v326
    %771 = vmatpush1.bf16.msra.mxu0 %v325
    %772 = vmatprep.subr.bf16.mxu0 %v330
    %773 = vmatpush1.bf16.msra.mxu0 %v329
    %774 = vmatprep.subr.bf16.mxu0 %v334
    %775 = vmatpush1.bf16.msra.mxu0 %v333
    %776 = vmatprep.subr.bf16.mxu0 %v338
    %777 = vmatpush1.bf16.msra.mxu0 %v337
    %778 = vmatprep.subr.bf16.mxu0 %v342
    %779 = vmatpush1.bf16.msra.mxu0 %v341
    %780 = vmatprep.subr.bf16.mxu0 %v346
    %781 = vmatpush1.bf16.msra.mxu0 %v345
    %782 = vmatprep.subr.bf16.mxu0 %v350
    %783 = vmatpush1.bf16.msra.mxu0 %v349
    %784 = vmatprep.subr.bf16.mxu0 %v354
    %785 = vmatpush1.bf16.msra.mxu0 %v353
    %786 = vmatprep.subr.bf16.mxu0 %v358
    %787 = vmatpush1.bf16.msra.mxu0 %v357
    %788 = vmatprep.subr.bf16.mxu0 %v362
    %789 = vmatpush1.bf16.msra.mxu0 %v361
    %790 = vmatprep.subr.bf16.mxu0 %v366
    %791 = vmatpush1.bf16.msra.mxu0 %v365
    %792 = vmatprep.subr.bf16.mxu0 %v370
    %793 = vmatpush1.bf16.msra.mxu0 %v369
    %794 = vmatprep.mubr.bf16.mxu0 %v547
    %795 = vmatmul.mubr.bf16.gmra.mrb[0].mxu0 %v545
    %v796 = vpop.f32.mrb[0].mxu0
    %v797 = vadd.f32 %v756, %v796
    %v798 = vpop.f32.mrb[0].mxu0
    %v799 = vadd.f32 %v758, %v798
    %v800 = vpop.f32.mrb[0].mxu0
    %v801 = vpop.f32.mrb[0].mxu0
    %802 = vdwg.mxu0
    %803 = vmatprep.subr.bf16.mxu0 %v374
    %804 = vmatpush1.bf16.msra.mxu0 %v373
    %805 = vmatprep.subr.bf16.mxu0 %v378
    %806 = vmatpush1.bf16.msra.mxu0 %v377
    %807 = vmatprep.subr.bf16.mxu0 %v382
    %808 = vmatpush1.bf16.msra.mxu0 %v381
    %809 = vmatprep.subr.bf16.mxu0 %v386
    %810 = vmatpush1.bf16.msra.mxu0 %v385
    %811 = vmatprep.subr.bf16.mxu0 %v390
    %812 = vmatpush1.bf16.msra.mxu0 %v389
    %813 = vmatprep.subr.bf16.mxu0 %v394
    %814 = vmatpush1.bf16.msra.mxu0 %v393
    %815 = vmatprep.subr.bf16.mxu0 %v398
    %816 = vmatpush1.bf16.msra.mxu0 %v397
    %817 = vmatprep.subr.bf16.mxu0 %v402
    %818 = vmatpush1.bf16.msra.mxu0 %v401
    %819 = vmatprep.subr.bf16.mxu0 %v406
    %820 = vmatpush1.bf16.msra.mxu0 %v405
    %821 = vmatprep.subr.bf16.mxu0 %v410
    %822 = vmatpush1.bf16.msra.mxu0 %v409
    %823 = vmatprep.subr.bf16.mxu0 %v414
    %824 = vmatpush1.bf16.msra.mxu0 %v413
    %825 = vmatprep.subr.bf16.mxu0 %v418
    %826 = vmatpush1.bf16.msra.mxu0 %v417
    %827 = vmatprep.subr.bf16.mxu0 %v422
    %828 = vmatpush1.bf16.msra.mxu0 %v421
    %829 = vmatprep.subr.bf16.mxu0 %v426
    %830 = vmatpush1.bf16.msra.mxu0 %v425
    %831 = vmatprep.subr.bf16.mxu0 %v430
    %832 = vmatpush1.bf16.msra.mxu0 %v429
    %833 = vmatprep.subr.bf16.mxu0 %v434
    %834 = vmatpush1.bf16.msra.mxu0 %v433
    %835 = vmatprep.mubr.bf16.mxu0 %v544
    %836 = vmatmul.mubr.bf16.gmra.mrb[0].mxu0 %v530
    %v837 = vpop.f32.mrb[0].mxu0
    %v838 = vadd.f32 %v797, %v837
    %v839 = vpop.f32.mrb[0].mxu0
    %v840 = vadd.f32 %v799, %v839
    %v841 = vpop.f32.mrb[0].mxu0
    %v842 = vpop.f32.mrb[0].mxu0
    %843 = vdwg.mxu0
    %844 = vmatprep.subr.bf16.mxu0 %v438
    %845 = vmatpush1.bf16.msra.mxu0 %v437
    %846 = vmatprep.subr.bf16.mxu0 %v442
    %847 = vmatpush1.bf16.msra.mxu0 %v441
    %848 = vmatprep.subr.bf16.mxu0 %v446
    %849 = vmatpush1.bf16.msra.mxu0 %v445
    %850 = vmatprep.subr.bf16.mxu0 %v450
    %851 = vmatpush1.bf16.msra.mxu0 %v449
    %852 = vmatprep.subr.bf16.mxu0 %v454
    %853 = vmatpush1.bf16.msra.mxu0 %v453
    %854 = vmatprep.subr.bf16.mxu0 %v458
    %855 = vmatpush1.bf16.msra.mxu0 %v457
    %856 = vmatprep.subr.bf16.mxu0 %v462
    %857 = vmatpush1.bf16.msra.mxu0 %v461
    %858 = vmatprep.subr.bf16.mxu0 %v466
    %859 = vmatpush1.bf16.msra.mxu0 %v465
    %860 = vmatprep.subr.bf16.mxu0 %v470
    %861 = vmatpush1.bf16.msra.mxu0 %v469
    %862 = vmatprep.subr.bf16.mxu0 %v474
    %863 = vmatpush1.bf16.msra.mxu0 %v473
    %864 = vmatprep.subr.bf16.mxu0 %v478
    %865 = vmatpush1.bf16.msra.mxu0 %v477
    %866 = vmatprep.subr.bf16.mxu0 %v482
    %867 = vmatpush1.bf16.msra.mxu0 %v481
    %868 = vmatprep.subr.bf16.mxu0 %v486
    %869 = vmatpush1.bf16.msra.mxu0 %v485
    %870 = vmatprep.subr.bf16.mxu0 %v490
    %871 = vmatpush1.bf16.msra.mxu0 %v489
    %872 = vmatprep.subr.bf16.mxu0 %v494
    %873 = vmatpush1.bf16.msra.mxu0 %v493
    %874 = vmatprep.subr.bf16.mxu0 %v498
    %875 = vmatpush1.bf16.msra.mxu0 %v497
    %876 = vmatprep.mubr.bf16.mxu0 %v548
    %877 = vmatmul.mubr.bf16.gmra.mrb[0].mxu0 %v546
    %v878 = vpop.f32.mrb[0].mxu0
    %v879 = vadd.f32 %v838, %v878
    %v880 = vpop.f32.mrb[0].mxu0
    %v881 = vadd.f32 %v840, %v880
    %v882 = vpop.f32.mrb[0].mxu0
    %v883 = vpop.f32.mrb[0].mxu0
    %884 = vdwg.mxu0
    %v886 = vlaneseq
    %v887 = vshrl.u32 %v886, 7
    %v888 = vsub.s32 0, %v887
    %v889 = vrot.slane %v103, %v888
    %v890 = vlaneseq
    %v891 = vshrl.u32 %v890, 7
    %v892 = vsub.s32 1, %v891
    %v893 = vrot.slane %v103, %v892
    %v894 = vlaneseq
    %v895 = vshrl.u32 %v894, 7
    %v896 = vsub.s32 2, %v895
    %v897 = vrot.slane %v103, %v896
    %v898 = vlaneseq
    %v899 = vshrl.u32 %v898, 7
    %v900 = vsub.s32 3, %v899
    %v901 = vrot.slane %v103, %v900
    %v906 = vmul.f32 %v715, %v889
    %v907 = vmul.f32 %v717, %v893
    %v908 = vmul.f32 %v879, %v897
    %v909 = vmul.f32 %v881, %v901
    %v911 = vlaneseq
    %v912 = vshrl.u32 %v911, 7
    %v913 = vsub.s32 0, %v912
    %v914 = vrot.slane %v105, %v913
    %v915 = vlaneseq
    %v916 = vshrl.u32 %v915, 7
    %v917 = vsub.s32 1, %v916
    %v918 = vrot.slane %v105, %v917
    %v919 = vlaneseq
    %v920 = vshrl.u32 %v919, 7
    %v921 = vsub.s32 2, %v920
    %v922 = vrot.slane %v105, %v921
    %v923 = vlaneseq
    %v924 = vshrl.u32 %v923, 7
    %v925 = vsub.s32 3, %v924
    %v926 = vrot.slane %v105, %v925
    %v931 = vadd.f32 %v906, %v914
    %v932 = vadd.f32 %v907, %v918
    %v933 = vadd.f32 %v908, %v922
    %v934 = vadd.f32 %v909, %v926
    %v935 = vmax.f32 %v931, 0.0
    %v936 = vmax.f32 %v932, 0.0
    %v937 = vmax.f32 %v933, 0.0
    %v938 = vmax.f32 %v934, 0.0
    %v939 = vpack.c.bf16 %v935, %v935
    %v940 = vpack.c.bf16 %v936, %v936
    %v941 = vpack.c.bf16 %v937, %v937
    %v942 = vpack.c.bf16 %v938, %v938
    %v943 = vld [vmem:[#allocation7] sm:$0xff]
    %v944 = vld [vmem:[#allocation7 + $0x8] sm:$0xff]
    %v945 = vld [vmem:[#allocation7 + $0x10] sm:$0xff]
    %v946 = vld [vmem:[#allocation7 + $0x18] sm:$0xff]
    %v947 = vld [vmem:[#allocation7 + $0x20] sm:$0xff]
    %v948 = vld [vmem:[#allocation7 + $0x28] sm:$0xff]
    %v949 = vld [vmem:[#allocation7 + $0x30] sm:$0xff]
    %v950 = vld [vmem:[#allocation7 + $0x38] sm:$0xff]
    %v951 = vld [vmem:[#allocation7 + $0x40] sm:$0xff]
    %v952 = vld [vmem:[#allocation7 + $0x48] sm:$0xff]
    %v953 = vld [vmem:[#allocation7 + $0x50] sm:$0xff]
    %v954 = vld [vmem:[#allocation7 + $0x58] sm:$0xff]
    %v955 = vld [vmem:[#allocation7 + $0x60] sm:$0xff]
    %v956 = vld [vmem:[#allocation7 + $0x68] sm:$0xff]
    %v957 = vld [vmem:[#allocation7 + $0x70] sm:$0xff]
    %v958 = vld [vmem:[#allocation7 + $0x78] sm:$0xff]
    %v959 = vld [vmem:[#allocation7 + $0x80] sm:$0xff]
    %v960 = vld [vmem:[#allocation7 + $0x88] sm:$0xff]
    %v961 = vld [vmem:[#allocation7 + $0x90] sm:$0xff]
    %v962 = vld [vmem:[#allocation7 + $0x98] sm:$0xff]
    %v963 = vld [vmem:[#allocation7 + $0xa0] sm:$0xff]
    %v964 = vld [vmem:[#allocation7 + $0xa8] sm:$0xff]
    %v965 = vld [vmem:[#allocation7 + $0xb0] sm:$0xff]
    %v966 = vld [vmem:[#allocation7 + $0xb8] sm:$0xff]
    %v967 = vld [vmem:[#allocation7 + $0xc0] sm:$0xff]
    %v968 = vld [vmem:[#allocation7 + $0xc8] sm:$0xff]
    %v969 = vld [vmem:[#allocation7 + $0xd0] sm:$0xff]
    %v970 = vld [vmem:[#allocation7 + $0xd8] sm:$0xff]
    %v971 = vld [vmem:[#allocation7 + $0xe0] sm:$0xff]
    %v972 = vld [vmem:[#allocation7 + $0xe8] sm:$0xff]
    %v973 = vld [vmem:[#allocation7 + $0xf0] sm:$0xff]
    %v974 = vld [vmem:[#allocation7 + $0xf8] sm:$0xff]
    %v975 = vunpack.c.l.s8.bf16 %v943
    %v976 = vunpack.c.l.s8.bf16 %v944
    %v977 = vunpack.c.h.s8.bf16 %v943
    %v978 = vunpack.c.h.s8.bf16 %v944
    %v979 = vunpack.c.l.s8.bf16 %v945
    %v980 = vunpack.c.l.s8.bf16 %v946
    %v981 = vunpack.c.h.s8.bf16 %v945
    %v982 = vunpack.c.h.s8.bf16 %v946
    %v983 = vunpack.c.l.s8.bf16 %v947
    %v984 = vunpack.c.l.s8.bf16 %v948
    %v985 = vunpack.c.h.s8.bf16 %v947
    %v986 = vunpack.c.h.s8.bf16 %v948
    %v987 = vunpack.c.l.s8.bf16 %v949
    %v988 = vunpack.c.l.s8.bf16 %v950
    %v989 = vunpack.c.h.s8.bf16 %v949
    %v990 = vunpack.c.h.s8.bf16 %v950
    %v991 = vunpack.c.l.s8.bf16 %v951
    %v992 = vunpack.c.l.s8.bf16 %v952
    %v993 = vunpack.c.h.s8.bf16 %v951
    %v994 = vunpack.c.h.s8.bf16 %v952
    %v995 = vunpack.c.l.s8.bf16 %v953
    %v996 = vunpack.c.l.s8.bf16 %v954
    %v997 = vunpack.c.h.s8.bf16 %v953
    %v998 = vunpack.c.h.s8.bf16 %v954
    %v999 = vunpack.c.l.s8.bf16 %v955
    %v1000 = vunpack.c.l.s8.bf16 %v956
    %v1001 = vunpack.c.h.s8.bf16 %v955
    %v1002 = vunpack.c.h.s8.bf16 %v956
    %v1003 = vunpack.c.l.s8.bf16 %v957
    %v1004 = vunpack.c.l.s8.bf16 %v958
    %v1005 = vunpack.c.h.s8.bf16 %v957
    %v1006 = vunpack.c.h.s8.bf16 %v958
    %v1007 = vunpack.c.l.s8.bf16 %v959
    %v1008 = vunpack.c.l.s8.bf16 %v960
    %v1009 = vunpack.c.h.s8.bf16 %v959
    %v1010 = vunpack.c.h.s8.bf16 %v960
    %v1011 = vunpack.c.l.s8.bf16 %v961
    %v1012 = vunpack.c.l.s8.bf16 %v962
    %v1013 = vunpack.c.h.s8.bf16 %v961
    %v1014 = vunpack.c.h.s8.bf16 %v962
    %v1015 = vunpack.c.l.s8.bf16 %v963
    %v1016 = vunpack.c.l.s8.bf16 %v964
    %v1017 = vunpack.c.h.s8.bf16 %v963
    %v1018 = vunpack.c.h.s8.bf16 %v964
    %v1019 = vunpack.c.l.s8.bf16 %v965
    %v1020 = vunpack.c.l.s8.bf16 %v966
    %v1021 = vunpack.c.h.s8.bf16 %v965
    %v1022 = vunpack.c.h.s8.bf16 %v966
    %v1023 = vunpack.c.l.s8.bf16 %v967
    %v1024 = vunpack.c.l.s8.bf16 %v968
    %v1025 = vunpack.c.h.s8.bf16 %v967
    %v1026 = vunpack.c.h.s8.bf16 %v968
    %v1027 = vunpack.c.l.s8.bf16 %v969
    %v1028 = vunpack.c.l.s8.bf16 %v970
    %v1029 = vunpack.c.h.s8.bf16 %v969
    %v1030 = vunpack.c.h.s8.bf16 %v970
    %v1031 = vunpack.c.l.s8.bf16 %v971
    %v1032 = vunpack.c.l.s8.bf16 %v972
    %v1033 = vunpack.c.h.s8.bf16 %v971
    %v1034 = vunpack.c.h.s8.bf16 %v972
    %v1035 = vunpack.c.l.s8.bf16 %v973
    %v1036 = vunpack.c.l.s8.bf16 %v974
    %v1037 = vunpack.c.h.s8.bf16 %v973
    %v1038 = vunpack.c.h.s8.bf16 %v974
    %1039 = vmatprep.subr.bf16.mxu0 %v976
    %1040 = vmatpush1.bf16.msra.mxu0 %v975
    %1041 = vmatprep.subr.bf16.mxu0 %v978
    %1042 = vmatpush1.bf16.msra.mxu0 %v977
    %1043 = vmatprep.subr.bf16.mxu0 %v980
    %1044 = vmatpush1.bf16.msra.mxu0 %v979
    %1045 = vmatprep.subr.bf16.mxu0 %v982
    %1046 = vmatpush1.bf16.msra.mxu0 %v981
    %1047 = vmatprep.subr.bf16.mxu0 %v984
    %1048 = vmatpush1.bf16.msra.mxu0 %v983
    %1049 = vmatprep.subr.bf16.mxu0 %v986
    %1050 = vmatpush1.bf16.msra.mxu0 %v985
    %1051 = vmatprep.subr.bf16.mxu0 %v988
    %1052 = vmatpush1.bf16.msra.mxu0 %v987
    %1053 = vmatprep.subr.bf16.mxu0 %v990
    %1054 = vmatpush1.bf16.msra.mxu0 %v989
    %1055 = vmatprep.subr.bf16.mxu0 %v992
    %1056 = vmatpush1.bf16.msra.mxu0 %v991
    %1057 = vmatprep.subr.bf16.mxu0 %v994
    %1058 = vmatpush1.bf16.msra.mxu0 %v993
    %1059 = vmatprep.subr.bf16.mxu0 %v996
    %1060 = vmatpush1.bf16.msra.mxu0 %v995
    %1061 = vmatprep.subr.bf16.mxu0 %v998
    %1062 = vmatpush1.bf16.msra.mxu0 %v997
    %1063 = vmatprep.subr.bf16.mxu0 %v1000
    %1064 = vmatpush1.bf16.msra.mxu0 %v999
    %1065 = vmatprep.subr.bf16.mxu0 %v1002
    %1066 = vmatpush1.bf16.msra.mxu0 %v1001
    %1067 = vmatprep.subr.bf16.mxu0 %v1004
    %1068 = vmatpush1.bf16.msra.mxu0 %v1003
    %1069 = vmatprep.subr.bf16.mxu0 %v1006
    %1070 = vmatpush1.bf16.msra.mxu0 %v1005
    %1071 = vmatprep.mubr.bf16.mxu0 %v940
    %1072 = vmatmul.mubr.bf16.gmra.mrb[0].mxu0 %v939
    %v1073 = vpop.f32.mrb[0].mxu0
    %v1074 = vadd.f32 0.0, %v1073
    %v1075 = vpop.f32.mrb[0].mxu0
    %v1076 = vadd.f32 0.0, %v1075
    %v1077 = vpop.f32.mrb[0].mxu0
    %v1078 = vpop.f32.mrb[0].mxu0
    %1079 = vdwg.mxu0
    %1080 = vmatprep.subr.bf16.mxu0 %v1008
    %1081 = vmatpush1.bf16.msra.mxu0 %v1007
    %1082 = vmatprep.subr.bf16.mxu0 %v1010
    %1083 = vmatpush1.bf16.msra.mxu0 %v1009
    %1084 = vmatprep.subr.bf16.mxu0 %v1012
    %1085 = vmatpush1.bf16.msra.mxu0 %v1011
    %1086 = vmatprep.subr.bf16.mxu0 %v1014
    %1087 = vmatpush1.bf16.msra.mxu0 %v1013
    %1088 = vmatprep.subr.bf16.mxu0 %v1016
    %1089 = vmatpush1.bf16.msra.mxu0 %v1015
    %1090 = vmatprep.subr.bf16.mxu0 %v1018
    %1091 = vmatpush1.bf16.msra.mxu0 %v1017
    %1092 = vmatprep.subr.bf16.mxu0 %v1020
    %1093 = vmatpush1.bf16.msra.mxu0 %v1019
    %1094 = vmatprep.subr.bf16.mxu0 %v1022
    %1095 = vmatpush1.bf16.msra.mxu0 %v1021
    %1096 = vmatprep.subr.bf16.mxu0 %v1024
    %1097 = vmatpush1.bf16.msra.mxu0 %v1023
    %1098 = vmatprep.subr.bf16.mxu0 %v1026
    %1099 = vmatpush1.bf16.msra.mxu0 %v1025
    %1100 = vmatprep.subr.bf16.mxu0 %v1028
    %1101 = vmatpush1.bf16.msra.mxu0 %v1027
    %1102 = vmatprep.subr.bf16.mxu0 %v1030
    %1103 = vmatpush1.bf16.msra.mxu0 %v1029
    %1104 = vmatprep.subr.bf16.mxu0 %v1032
    %1105 = vmatpush1.bf16.msra.mxu0 %v1031
    %1106 = vmatprep.subr.bf16.mxu0 %v1034
    %1107 = vmatpush1.bf16.msra.mxu0 %v1033
    %1108 = vmatprep.subr.bf16.mxu0 %v1036
    %1109 = vmatpush1.bf16.msra.mxu0 %v1035
    %1110 = vmatprep.subr.bf16.mxu0 %v1038
    %1111 = vmatpush1.bf16.msra.mxu0 %v1037
    %1112 = vmatprep.mubr.bf16.mxu0 %v942
    %1113 = vmatmul.mubr.bf16.gmra.mrb[0].mxu0 %v941
    %v1114 = vpop.f32.mrb[0].mxu0
    %v1115 = vadd.f32 %v1074, %v1114
    %v1116 = vpop.f32.mrb[0].mxu0
    %v1117 = vadd.f32 %v1076, %v1116
    %v1118 = vpop.f32.mrb[0].mxu0
    %v1119 = vpop.f32.mrb[0].mxu0
    %1120 = vdwg.mxu0
    %v1122 = vlaneseq
    %v1123 = vshrl.u32 %v1122, 7
    %v1124 = vsub.s32 0, %v1123
    %v1125 = vrot.slane %v107, %v1124
    %v1126 = vlaneseq
    %v1127 = vshrl.u32 %v1126, 7
    %v1128 = vsub.s32 1, %v1127
    %v1129 = vrot.slane %v107, %v1128
    %v1132 = vmul.f32 %v1115, %v1125
    %v1133 = vmul.f32 %v1117, %v1129
    %v1135 = vlaneseq
    %v1136 = vshrl.u32 %v1135, 7
    %v1137 = vsub.s32 0, %v1136
    %v1138 = vrot.slane %v109, %v1137
    %v1139 = vlaneseq
    %v1140 = vshrl.u32 %v1139, 7
    %v1141 = vsub.s32 1, %v1140
    %v1142 = vrot.slane %v109, %v1141
    %v1145 = vadd.f32 %v1132, %v1138
    %v1146 = vadd.f32 %v1133, %v1142
    %v1147 = vmax.f32 %v1145, 0.0
    %v1148 = vmax.f32 %v1146, 0.0
    %v1149 = vpack.c.bf16 %v1147, %v1147
    %v1150 = vpack.c.bf16 %v1148, %v1148
    %v1151 = vld [vmem:[#allocation8] sm:$0xff]
    %v1152 = vld [vmem:[#allocation8 + $0x8] sm:$0xff]
    %v1153 = vld [vmem:[#allocation8 + $0x10] sm:$0xff]
    %v1154 = vld [vmem:[#allocation8 + $0x18] sm:$0xff]
    %v1155 = vld [vmem:[#allocation8 + $0x20] sm:$0xff]
    %v1156 = vld [vmem:[#allocation8 + $0x28] sm:$0xff]
    %v1157 = vld [vmem:[#allocation8 + $0x30] sm:$0xff]
    %v1158 = vld [vmem:[#allocation8 + $0x38] sm:$0xff]
    %v1159 = vunpack.c.l.s8.bf16 %v1151
    %v1160 = vunpack.c.h.s8.bf16 %v1151
    %v1161 = vunpack.c.l.s8.bf16 %v1152
    %v1162 = vunpack.c.h.s8.bf16 %v1152
    %v1163 = vunpack.c.l.s8.bf16 %v1153
    %v1164 = vunpack.c.h.s8.bf16 %v1153
    %v1165 = vunpack.c.l.s8.bf16 %v1154
    %v1166 = vunpack.c.h.s8.bf16 %v1154
    %v1167 = vunpack.c.l.s8.bf16 %v1155
    %v1168 = vunpack.c.h.s8.bf16 %v1155
    %v1169 = vunpack.c.l.s8.bf16 %v1156
    %v1170 = vunpack.c.h.s8.bf16 %v1156
    %v1171 = vunpack.c.l.s8.bf16 %v1157
    %v1172 = vunpack.c.h.s8.bf16 %v1157
    %v1173 = vunpack.c.l.s8.bf16 %v1158
    %v1174 = vunpack.c.h.s8.bf16 %v1158
    %1175 = vmatprep.subr.bf16.mxu0 0
    %1176 = vmatpush1.bf16.msra.mxu0 %v1159
    %1177 = vmatprep.subr.bf16.mxu0 0
    %1178 = vmatpush1.bf16.msra.mxu0 %v1160
    %1179 = vmatprep.subr.bf16.mxu0 0
    %1180 = vmatpush1.bf16.msra.mxu0 %v1161
    %1181 = vmatprep.subr.bf16.mxu0 0
    %1182 = vmatpush1.bf16.msra.mxu0 %v1162
    %1183 = vmatprep.subr.bf16.mxu0 0
    %1184 = vmatpush1.bf16.msra.mxu0 %v1163
    %1185 = vmatprep.subr.bf16.mxu0 0
    %1186 = vmatpush1.bf16.msra.mxu0 %v1164
    %1187 = vmatprep.subr.bf16.mxu0 0
    %1188 = vmatpush1.bf16.msra.mxu0 %v1165
    %1189 = vmatprep.subr.bf16.mxu0 0
    %1190 = vmatpush1.bf16.msra.mxu0 %v1166
    %1191 = vmatprep.subr.bf16.mxu0 0
    %1192 = vmatpush1.bf16.msra.mxu0 %v1167
    %1193 = vmatprep.subr.bf16.mxu0 0
    %1194 = vmatpush1.bf16.msra.mxu0 %v1168
    %1195 = vmatprep.subr.bf16.mxu0 0
    %1196 = vmatpush1.bf16.msra.mxu0 %v1169
    %1197 = vmatprep.subr.bf16.mxu0 0
    %1198 = vmatpush1.bf16.msra.mxu0 %v1170
    %1199 = vmatprep.subr.bf16.mxu0 0
    %1200 = vmatpush1.bf16.msra.mxu0 %v1171
    %1201 = vmatprep.subr.bf16.mxu0 0
    %1202 = vmatpush1.bf16.msra.mxu0 %v1172
    %1203 = vmatprep.subr.bf16.mxu0 0
    %1204 = vmatpush1.bf16.msra.mxu0 %v1173
    %1205 = vmatprep.subr.bf16.mxu0 0
    %1206 = vmatpush1.bf16.msra.mxu0 %v1174
    %1207 = vmatprep.mubr.bf16.mxu0 %v1150
    %1208 = vmatmul.mubr.bf16.gmra.mrb[0].mxu0 %v1149
    %v1209 = vpop.f32.mrb[0].mxu0
    %v1210 = vadd.f32 0.0, %v1209
    %v1211 = vpop.f32.mrb[0].mxu0
    %v1212 = vpop.f32.mrb[0].mxu0
    %v1213 = vpop.f32.mrb[0].mxu0
    %1214 = vdwg.mxu0
    %v1215 = vmul.f32 %v1210, %v110
    %v1216 = vadd.f32 %v1215, %v111
    %v1217 = vmax.f32 %v1216, 0.0
    %v1218 = vpack.c.bf16 %v1217, %v1217
    %v1219 = vld [vmem:[#allocation10] sm:$0xff]
    %v1220 = vld [vmem:[#allocation10 + $0x8] sm:$0xff]
    %v1221 = vld [vmem:[#allocation10 + $0x10] sm:$0xff]
    %v1222 = vld [vmem:[#allocation10 + $0x18] sm:$0xff]
    %v1223 = vunpack.c.l.s8.bf16 %v1219
    %v1224 = vunpack.c.h.s8.bf16 %v1219
    %v1225 = vunpack.c.l.s8.bf16 %v1220
    %v1226 = vunpack.c.h.s8.bf16 %v1220
    %v1227 = vunpack.c.l.s8.bf16 %v1221
    %v1228 = vunpack.c.h.s8.bf16 %v1221
    %v1229 = vunpack.c.l.s8.bf16 %v1222
    %v1230 = vunpack.c.h.s8.bf16 %v1222
    %1231 = vmatprep.subr.bf16.mxu0 0
    %1232 = vmatpush1.bf16.msra.mxu0 %v1223
    %1233 = vmatprep.subr.bf16.mxu0 0
    %1234 = vmatpush1.bf16.msra.mxu0 %v1224
    %1235 = vmatprep.subr.bf16.mxu0 0
    %1236 = vmatpush1.bf16.msra.mxu0 %v1225
    %1237 = vmatprep.subr.bf16.mxu0 0
    %1238 = vmatpush1.bf16.msra.mxu0 %v1226
    %1239 = vmatprep.subr.bf16.mxu0 0
    %1240 = vmatpush1.bf16.msra.mxu0 %v1227
    %1241 = vmatprep.subr.bf16.mxu0 0
    %1242 = vmatpush1.bf16.msra.mxu0 %v1228
    %1243 = vmatprep.subr.bf16.mxu0 0
    %1244 = vmatpush1.bf16.msra.mxu0 %v1229
    %1245 = vmatprep.subr.bf16.mxu0 0
    %1246 = vmatpush1.bf16.msra.mxu0 %v1230
    %1247 = vmatprep.subr.bf16.mxu0 0
    %1248 = vmatpush1.bf16.msra.mxu0 0
    %1249 = vmatprep.subr.bf16.mxu0 0
    %1250 = vmatpush1.bf16.msra.mxu0 0
    %1251 = vmatprep.subr.bf16.mxu0 0
    %1252 = vmatpush1.bf16.msra.mxu0 0
    %1253 = vmatprep.subr.bf16.mxu0 0
    %1254 = vmatpush1.bf16.msra.mxu0 0
    %1255 = vmatprep.subr.bf16.mxu0 0
    %1256 = vmatpush1.bf16.msra.mxu0 0
    %1257 = vmatprep.subr.bf16.mxu0 0
    %1258 = vmatpush1.bf16.msra.mxu0 0
    %1259 = vmatprep.subr.bf16.mxu0 0
    %1260 = vmatpush1.bf16.msra.mxu0 0
    %1261 = vmatprep.subr.bf16.mxu0 0
    %1262 = vmatpush1.bf16.msra.mxu0 0
    %1263 = vmatprep.mubr.bf16.mxu0 0
    %1264 = vmatmul.mubr.bf16.gmra.mrb[0].mxu0 %v1218
    %v1265 = vpop.f32.mrb[0].mxu0
    %v1266 = vadd.f32 0.0, %v1265
    %v1267 = vpop.f32.mrb[0].mxu0
    %v1268 = vpop.f32.mrb[0].mxu0
    %v1269 = vpop.f32.mrb[0].mxu0
    %1270 = vdwg.mxu0
    %v1271 = vmul.f32 %v1266, %v112
    %v1272 = vadd.f32 %v1271, %v113
    %1273 = vst [vmem:[#allocation13] sm:$0x3] %v1272
    // Predicated region
    $region50: #{tpu_custom_call.1} parent=1 // pred_check
      _
    $region51: #{tpu_custom_call.1} parent=1 // pred_check_branch
      %1275 = sbr.rel (0) target = $region53
    $region52: #{tpu_custom_call.1} parent=1 // pred_region
      %s1277 = ssub.s32 32, 32
      %1278 = vsyncadd [#allocation4], %s1277
      %s1280 = sshll.u32 [#allocation13], 4
      %s1281 = int_to_ptr.vmem [resolvable:$true] %s1280
      %1283 = dma.vmem_to_hbm [thread:$0]  %s1281, 32, %s6, [#allocation4]
    $region53: #{tpu_custom_call.1} parent=1 // pred_fallthru
      _
    // Predicated region
    $region54: #{tpu_custom_call.1} parent=1 // pred_check
      _
    $region55: #{tpu_custom_call.1} parent=1 // pred_check_branch
      %1285 = sbr.rel (0) target = $region57
    $region56: #{tpu_custom_call.1} parent=1 // pred_region
      %1286 = dma.done [#allocation4], 32
    $region57: #{tpu_custom_call.1} parent=1 // pred_fallthru
      _
    %1287 = vsyncpa [#allocation3], 1
    %1288 = vsyncpa [#allocation6], 1
    %1289 = vsyncpa [#allocation9], 1
    %1290 = vsyncpa [#allocation12], 1
    %1291 = vsyncpa [#allocation4], 1

</llo_original>
